<compile_context>
chip_gen: v5e
topology: v5e:2x2
jax: 0.10.0
libtpu: 0.0.40
codegen_flags: <defaults>
</compile_context>

<pallas_src>
import math
import functools

import jax
import jax.numpy as jnp
from jax.experimental import pallas as pl
from jax.experimental.pallas import tpu as pltpu

_MM_DTYPE = jnp.bfloat16   # MXU operand dtype (f32 accumulation everywhere)
_LANE = 128


def _mm(a, b):
    """MXU matmul: bf16 operands, f32 accumulation."""
    return jnp.dot(a.astype(_MM_DTYPE), b.astype(_MM_DTYPE),
                   preferred_element_type=jnp.float32)


def _layer_norm(x, g, b, eps=1e-6):
    mu = jnp.mean(x, axis=-1, keepdims=True)
    var = jnp.mean((x - mu) ** 2, axis=-1, keepdims=True)
    return (x - mu) * jax.lax.rsqrt(var + eps) * g + b


def _gelu_tanh(x):
    c = math.sqrt(2.0 / math.pi)
    return 0.5 * x * (1.0 + jnp.tanh(c * (x + 0.044715 * x * x * x)))


# ----------------------------- fused kernel ----------------------------------

def _bert_kernel(num_heads, cb, seq,
                 # inputs ------------------------------------------------------
                 x_ref, bias_ref,
                 wqkv_ref, bqkv_ref, wo_ref, bo_ref,
                 ln1g_ref, ln1b_ref, ln2g_ref, ln2b_ref,
                 w1_ref, b1_ref, w2_ref, b2_ref,
                 ln3g_ref, ln3b_ref,
                 fc1w_hbm, fc1b_ref, lng_ref, lnb_ref, fc2w_hbm, fc2b_ref,
                 # output ------------------------------------------------------
                 out_ref,
                 # scratch -----------------------------------------------------
                 act_ref, attn_ref, fc1w_vmem, fc2w_vmem):
    """One encoder layer for one batch chunk per grid step.

    grid = (chunk, layer); activations carried in act_ref across the layer axis.
    """
    l = pl.program_id(1)
    num_l = pl.num_programs(1)

    # Load the chunk's (rows, D) activations at the first layer step.
    @pl.when(l == 0)
    def _():
        act_ref[...] = x_ref[...]

    x = act_ref[...]                         # (rows, D) f32
    D = x.shape[-1]
    dp = D // num_heads

    # ---- sub-layer 1: LayerNorm1 + multi-head self-attention ---------------
    h = _layer_norm(x, ln1g_ref[0], ln1b_ref[0])

    # Fused QKV projection: one (rows, D) @ (D, 3D) MXU matmul.
    # (1/sqrt(dp) is already folded into the Wq / bq slice at init.)
    qkv = _mm(h, wqkv_ref[0]) + bqkv_ref[0]          # (rows, 3D) f32

    # Attention must stay per batch element; heads write straight into the
    # (rows, D) scratch at lane offset hd*dp (no concat / relayout).
    for bi in range(cb):
        r0 = bi * seq
        bias = bias_ref[bi]                          # (S, S) = mask*-1e9 + adjoin
        for hd in range(num_heads):
            c0 = hd * dp
            qh = qkv[r0:r0 + seq, c0:c0 + dp]
            kh = qkv[r0:r0 + seq, D + c0:D + c0 + dp]
            vh = qkv[r0:r0 + seq, 2 * D + c0:2 * D + c0 + dp]
            s = _mm(qh, kh.T) + bias                 # (S, S) f32
            s = s - jnp.max(s, axis=-1, keepdims=True)
            p = jnp.exp(s)
            p = p * pl.reciprocal(jnp.sum(p, axis=-1, keepdims=True),
                                  approx=True)       # EUP slot
            attn_ref[r0:r0 + seq, c0:c0 + dp] = _mm(p, vh)

    attn_out = _mm(attn_ref[...], wo_ref[0]) + bo_ref[0]   # dense(concat(heads))

    # dropout1 = identity (eval).  Reference reuses the LN1 output as residual.
    x = _layer_norm(h + attn_out, ln2g_ref[0], ln2b_ref[0])

    # ---- sub-layer 2: position-wise feed-forward ----------------------------
    ff = _gelu_tanh(_mm(x, w1_ref[0]) + b1_ref[0])
    ff = _mm(ff, w2_ref[0]) + b2_ref[0]
    # dropout2 = identity (eval)
    x = _layer_norm(x + ff, ln3g_ref[0], ln3b_ref[0])
    act_ref[...] = x                                  # carry to next layer step

    # ---- output head only on the last layer step ----------------------------
    @pl.when(l == num_l - 1)
    def _():
        # Grid-constant head matrices live in HBM (pl.ANY) and are DMA'd once
        # per chunk into single-buffer VMEM scratch (no pipeline double-buffer).
        pltpu.sync_copy(fc1w_hbm, fc1w_vmem)
        pltpu.sync_copy(fc2w_hbm, fc2w_vmem)
        hh = _gelu_tanh(_mm(x, fc1w_vmem[...]) + fc1b_ref[...])
        hh = _layer_norm(hh, lng_ref[...], lnb_ref[...])
        # Only HBM store of the kernel; vocab padded to 128 lanes -> lane-dense.
        out_ref[...] = _mm(hh, fc2w_vmem[...]) + fc2b_ref[...]


# ----------------------------- wrapper ----------------------------------------

_STACKED = ("wqkv", "bqkv", "wo", "bo", "ln1_g", "ln1_b", "ln2_g", "ln2_b",
            "ff1_w", "ff1_b", "ff2_w", "ff2_b", "ln3_g", "ln3_b")


def _nbytes(a):
    return a.size * a.dtype.itemsize


def bert_forward(tokens, mask, adjoin_matrix, params, *,
                 num_heads, d_model, vocab_size):
    # XLA glue: embedding gather + sqrt(d_model) scale; combine padding mask
    # (B,1,1,S) and adjoin_matrix (B,S,S) into one additive bias shared by all
    # heads.  Encoder dropout = identity (eval).
    # TODO(synk): token-id embedding gather and the final vocab slice stay as
    # XLA glue around the single pallas_call (data-dependent gather at vocab=18
    # is not worth an in-kernel DMA gather).
    x = jnp.take(params["embedding"], tokens, axis=0) * math.sqrt(d_model)
    x = x.astype(jnp.float32)
    attn_bias = (mask * -1e9 + adjoin_matrix[:, None, :, :])[:, 0]
    attn_bias = attn_bias.astype(jnp.float32)

    B, S, D = x.shape
    num_layers = params["wqkv"].shape[0]
    vpad = params["fc2_w"].shape[1]

    # >=2 parallel chunks keeps both v7x TensorCores busy; each chunk flattens
    # its CB batch elements to (CB*S, D) rows so the non-attention matmuls run
    # batch-wide in a single grid step.
    nchunk = 2 if (B % 2 == 0 and B >= 2) else 1
    cb = B // nchunk
    rows = cb * S
    x_flat = x.reshape(B * S, D)

    def layer_spec(arr):       # stacked (L, ...) weights: one layer per step
        nd = arr.ndim
        return pl.BlockSpec((1,) + arr.shape[1:],
                            lambda c, l, nd=nd: (l,) + (0,) * (nd - 1))

    def const_spec(arr):       # small grid-constant params (auto-pipelined)
        nd = arr.ndim
        return pl.BlockSpec(arr.shape, lambda c, l, nd=nd: (0,) * nd)

    in_specs = [
        pl.BlockSpec((rows, D), lambda c, l: (c, 0)),      # x (flattened rows)
        pl.BlockSpec((cb, S, S), lambda c, l: (c, 0, 0)),  # attention bias
    ]
    in_specs += [layer_spec(params[n]) for n in _STACKED]
    in_specs += [
        pl.BlockSpec(memory_space=pl.ANY),                 # fc1_w (manual DMA)
        const_spec(params["fc1_b"]),
        const_spec(params["ln_g"]),
        const_spec(params["ln_b"]),
        pl.BlockSpec(memory_space=pl.ANY),                 # fc2_w (manual DMA)
        const_spec(params["fc2_b"]),
    ]

    args = [x_flat, attn_bias] + [params[n] for n in _STACKED] + [
        params["fc1_w"], params["fc1_b"], params["ln_g"], params["ln_b"],
        params["fc2_w"], params["fc2_b"],
    ]

    # VMEM budget: per-layer blocks are double-buffered; head + activation
    # blocks + scratch single/doubled.  Generous 4x headroom, 16 MiB floor.
    per_layer = sum(_nbytes(params[n]) // num_layers for n in _STACKED)
    head = sum(_nbytes(params[n]) for n in
               ("fc1_w", "fc1_b", "ln_g", "ln_b", "fc2_w", "fc2_b"))
    act = rows * D * 4 + cb * S * S * 4 + 2 * rows * vpad * 4
    scratch = 2 * rows * D * 4 + D * D * 2 + D * vpad * 2
    vmem_limit = int(min(max(4 * (2 * per_layer + 2 * head + act + scratch),
                             16 << 20), 100 << 20))

    logits_flat = pl.pallas_call(
        functools.partial(_bert_kernel, num_heads, cb, S),
        out_shape=jax.ShapeDtypeStruct((B * S, vpad), jnp.float32),
        grid=(nchunk, num_layers),
        in_specs=in_specs,
        out_specs=pl.BlockSpec((rows, vpad), lambda c, l: (c, 0)),
        scratch_shapes=[
            pltpu.VMEM((rows, D), jnp.float32),     # activation carry
            pltpu.VMEM((rows, D), jnp.float32),     # per-head attention output
            pltpu.VMEM((D, D), _MM_DTYPE),          # fc1_w (single buffer)
            pltpu.VMEM((D, vpad), _MM_DTYPE),       # fc2_w (single buffer)
        ],
        compiler_params=pltpu.CompilerParams(
            dimension_semantics=("parallel", "arbitrary"),
            vmem_limit_bytes=vmem_limit),
    )(*args)

    # Strip the lane padding on the vocab axis and restore (B, S, V).
    return logits_flat.reshape(B, S, vpad)[:, :, :vocab_size]


# ----------------------------- parameter init ---------------------------------

def init_params(key, num_layers, d_model, num_heads, d_ff, vocab_size):
    ks = jax.random.split(key, 4)

    def w(k, shape, std=0.02):
        return jax.random.normal(k, shape, jnp.float32) * std

    vpad = max(_LANE, ((vocab_size + _LANE - 1) // _LANE) * _LANE)
    dp = d_model // num_heads
    qscale = 1.0 / math.sqrt(dp)          # attention scale folded into Wq / bq

    p = {"embedding": w(ks[0], (vocab_size, d_model))}

    # Output head: matmul weights bf16, biases / LN params f32 (no logit quant).
    p["fc1_w"] = w(ks[1], (d_model, d_model)).astype(_MM_DTYPE)
    p["fc1_b"] = jnp.zeros((1, d_model), jnp.float32)
    p["ln_g"] = jnp.ones((1, d_model), jnp.float32)
    p["ln_b"] = jnp.zeros((1, d_model), jnp.float32)
    # fc2 zero-padded on the vocab (lane) axis to a multiple of 128 so the
    # kernel's only HBM store is lane-dense; sliced back outside.
    fc2 = w(ks[2], (d_model, vocab_size))
    p["fc2_w"] = (jnp.zeros((d_model, vpad), jnp.float32)
                  .at[:, :vocab_size].set(fc2).astype(_MM_DTYPE))
    p["fc2_b"] = jnp.zeros((1, vpad), jnp.float32)

    # Per-layer weights stacked on a leading layer axis (one block per grid
    # step).  Wq/Wk/Wv fused; Wq pre-scaled by 1/sqrt(dp).
    kl = jax.random.split(ks[3], num_layers)
    wqkv, wo, w1, w2 = [], [], [], []
    for i in range(num_layers):
        kk = jax.random.split(kl[i], 5)
        wq = w(kk[0], (d_model, d_model)) * qscale
        wk = w(kk[1], (d_model, d_model))
        wv = w(kk[2], (d_model, d_model))
        wqkv.append(jnp.concatenate([wq, wk, wv], axis=1))
        wo.append(w(kk[3], (d_model, d_model)))
        k1, k2 = jax.random.split(kk[4])
        w1.append(w(k1, (d_model, d_ff)))
        w2.append(w(k2, (d_ff, d_model)))
    p["wqkv"] = jnp.stack(wqkv).astype(_MM_DTYPE)
    p["bqkv"] = jnp.zeros((num_layers, 1, 3 * d_model), jnp.float32)  # q-slice
    # of bqkv would also be scaled by qscale if nonzero.
    p["wo"] = jnp.stack(wo).astype(_MM_DTYPE)
    p["bo"] = jnp.zeros((num_layers, 1, d_model), jnp.float32)
    p["ff1_w"] = jnp.stack(w1).astype(_MM_DTYPE)
    p["ff1_b"] = jnp.zeros((num_layers, 1, d_ff), jnp.float32)
    p["ff2_w"] = jnp.stack(w2).astype(_MM_DTYPE)
    p["ff2_b"] = jnp.zeros((num_layers, 1, d_model), jnp.float32)
    for n in ("ln1", "ln2", "ln3"):
        p[f"{n}_g"] = jnp.ones((num_layers, 1, d_model), jnp.float32)
        p[f"{n}_b"] = jnp.zeros((num_layers, 1, d_model), jnp.float32)
    return p


# ----------------------------- main --------------------------------------------

if __name__ == "__main__":
    # Small config consistent with BertModel(num_layers, d_model, num_heads, d_ff, vocab).
    num_layers, d_model, num_heads, d_ff, vocab_size = 2, 32, 4, 64, 18
    batch, seq = 2, 8

    key = jax.random.PRNGKey(0)
    k_tok, k_adj, k_par = jax.random.split(key, 3)

    tokens = jax.random.randint(k_tok, (batch, seq), 0, vocab_size, jnp.int32)
    # Padding mask: (B,1,1,S); 1.0 -> masked key position.
    mask = jnp.zeros((batch, 1, 1, seq), jnp.float32)
    mask = mask.at[1, 0, 0, seq - 1].set(1.0)
    adjoin_matrix = jax.random.normal(k_adj, (batch, seq, seq), jnp.float32) * 0.1

    params = init_params(k_par, num_layers, d_model, num_heads, d_ff, vocab_size)

    fwd = jax.jit(functools.partial(bert_forward,
                                    num_heads=num_heads,
                                    d_model=d_model,
                                    vocab_size=vocab_size))
    out = fwd(tokens, mask, adjoin_matrix, params)
    out = jax.block_until_ready(out)
    assert out.shape == (batch, seq, vocab_size)
    print("KERNEL_OK")
</pallas_src>

<mosaic_0001>
module attributes {stable_mosaic.version = 11 : i64} {
  func.func @_bert_kernel(%arg0: i32, %arg1: i32, %arg2: memref<8x32xf32, #tpu.memory_space<vmem>>, %arg3: memref<1x8x8xf32, #tpu.memory_space<vmem>>, %arg4: memref<1x32x96xbf16, #tpu.memory_space<vmem>>, %arg5: memref<1x1x96xf32, #tpu.memory_space<vmem>>, %arg6: memref<1x32x32xbf16, #tpu.memory_space<vmem>>, %arg7: memref<1x1x32xf32, #tpu.memory_space<vmem>>, %arg8: memref<1x1x32xf32, #tpu.memory_space<vmem>>, %arg9: memref<1x1x32xf32, #tpu.memory_space<vmem>>, %arg10: memref<1x1x32xf32, #tpu.memory_space<vmem>>, %arg11: memref<1x1x32xf32, #tpu.memory_space<vmem>>, %arg12: memref<1x32x64xbf16, #tpu.memory_space<vmem>>, %arg13: memref<1x1x64xf32, #tpu.memory_space<vmem>>, %arg14: memref<1x64x32xbf16, #tpu.memory_space<vmem>>, %arg15: memref<1x1x32xf32, #tpu.memory_space<vmem>>, %arg16: memref<1x1x32xf32, #tpu.memory_space<vmem>>, %arg17: memref<1x1x32xf32, #tpu.memory_space<vmem>>, %arg18: memref<32x32xbf16, #tpu.memory_space<any>>, %arg19: memref<1x32xf32, #tpu.memory_space<vmem>>, %arg20: memref<1x32xf32, #tpu.memory_space<vmem>>, %arg21: memref<1x32xf32, #tpu.memory_space<vmem>>, %arg22: memref<32x128xbf16, #tpu.memory_space<any>>, %arg23: memref<1x128xf32, #tpu.memory_space<vmem>>, %arg24: memref<8x128xf32, #tpu.memory_space<vmem>>, %arg25: memref<8x32xf32, #tpu.memory_space<vmem>>, %arg26: memref<8x32xf32, #tpu.memory_space<vmem>>, %arg27: memref<32x32xbf16, #tpu.memory_space<vmem>>, %arg28: memref<32x128xbf16, #tpu.memory_space<vmem>>) attributes {dimension_semantics = [#tpu.dimension_semantics<parallel>, #tpu.dimension_semantics<arbitrary>], iteration_bounds = array<i64: 2, 2>, scalar_prefetch = 0 : i64, scratch_operands = 4 : i64, tpu.core_type = #tpu.core_type<tc>, window_params = [{transform_indices = @transform_0, window_bounds = array<i64: 8, 32>}, {transform_indices = @transform_1, window_bounds = array<i64: 1, 8, 8>}, {transform_indices = @transform_2, window_bounds = array<i64: 1, 32, 96>}, {transform_indices = @transform_3, window_bounds = array<i64: 1, 1, 96>}, {transform_indices = @transform_4, window_bounds = array<i64: 1, 32, 32>}, {transform_indices = @transform_5, window_bounds = array<i64: 1, 1, 32>}, {transform_indices = @transform_6, window_bounds = array<i64: 1, 1, 32>}, {transform_indices = @transform_7, window_bounds = array<i64: 1, 1, 32>}, {transform_indices = @transform_8, window_bounds = array<i64: 1, 1, 32>}, {transform_indices = @transform_9, window_bounds = array<i64: 1, 1, 32>}, {transform_indices = @transform_10, window_bounds = array<i64: 1, 32, 64>}, {transform_indices = @transform_11, window_bounds = array<i64: 1, 1, 64>}, {transform_indices = @transform_12, window_bounds = array<i64: 1, 64, 32>}, {transform_indices = @transform_13, window_bounds = array<i64: 1, 1, 32>}, {transform_indices = @transform_14, window_bounds = array<i64: 1, 1, 32>}, {transform_indices = @transform_15, window_bounds = array<i64: 1, 1, 32>}, {}, {pipeline_mode = #tpu.pipeline_mode<synchronous>, transform_indices = @transform_17, window_bounds = array<i64: 1, 32>}, {pipeline_mode = #tpu.pipeline_mode<synchronous>, transform_indices = @transform_18, window_bounds = array<i64: 1, 32>}, {pipeline_mode = #tpu.pipeline_mode<synchronous>, transform_indices = @transform_19, window_bounds = array<i64: 1, 32>}, {}, {pipeline_mode = #tpu.pipeline_mode<synchronous>, transform_indices = @transform_21, window_bounds = array<i64: 1, 128>}, {transform_indices = @transform_22, window_bounds = array<i64: 8, 128>}]} {
    %c0_i32 = arith.constant 0 : i32
    %0 = arith.cmpi eq, %arg1, %c0_i32 : i32
    %1 = arith.extui %0 : i1 to i32
    %c0_i32_0 = arith.constant 0 : i32
    %2 = arith.cmpi ne, %1, %c0_i32_0 : i32
    scf.if %2 {
      %c0_95 = arith.constant 0 : index
      %c0_96 = arith.constant 0 : index
      %224 = vector.load %arg2[%c0_95, %c0_96] : memref<8x32xf32, #tpu.memory_space<vmem>>, vector<8x32xf32>
      %c0_97 = arith.constant 0 : index
      %c0_98 = arith.constant 0 : index
      %225 = vector.load %arg25[%c0_97, %c0_98] : memref<8x32xf32, #tpu.memory_space<vmem>>, vector<8x32xf32>
      tpu.vector_store %arg25[%c0_97, %c0_98], %224 {strides = array<i32>} : memref<8x32xf32, #tpu.memory_space<vmem>>, vector<8x32xf32>,
    } else {
    }
    %c0 = arith.constant 0 : index
    %c0_1 = arith.constant 0 : index
    %3 = vector.load %arg25[%c0, %c0_1] : memref<8x32xf32, #tpu.memory_space<vmem>>, vector<8x32xf32>
    %c0_2 = arith.constant 0 : index
    %c0_3 = arith.constant 0 : index
    %c0_4 = arith.constant 0 : index
    %4 = vector.load %arg8[%c0_2, %c0_3, %c0_4] : memref<1x1x32xf32, #tpu.memory_space<vmem>>, vector<1x1x32xf32>
    %5 = vector.shape_cast %4 : vector<1x1x32xf32> to vector<1x32xf32>
    %c0_5 = arith.constant 0 : index
    %c0_6 = arith.constant 0 : index
    %c0_7 = arith.constant 0 : index
    %6 = vector.load %arg9[%c0_5, %c0_6, %c0_7] : memref<1x1x32xf32, #tpu.memory_space<vmem>>, vector<1x1x32xf32>
    %7 = vector.shape_cast %6 : vector<1x1x32xf32> to vector<1x32xf32>
    %cst = arith.constant dense<0.000000e+00> : vector<8xf32>
    %8 = vector.multi_reduction <add>, %3, %cst [1] : vector<8x32xf32> to vector<8xf32>
    %9 = vector.shape_cast %8 : vector<8xf32> to vector<8x1xf32>
    %cst_8 = arith.constant 3.200000e+01 : f32
    %10 = vector.broadcast %cst_8 : f32 to vector<8x1xf32>
    %11 = arith.divf %9, %10 : vector<8x1xf32>
    %12 = vector.broadcast %11 : vector<8x1xf32> to vector<8x32xf32>
    %13 = arith.subf %3, %12 : vector<8x32xf32>
    %14 = arith.mulf %13, %13 : vector<8x32xf32>
    %cst_9 = arith.constant dense<0.000000e+00> : vector<8xf32>
    %15 = vector.multi_reduction <add>, %14, %cst_9 [1] : vector<8x32xf32> to vector<8xf32>
    %16 = vector.shape_cast %15 : vector<8xf32> to vector<8x1xf32>
    %cst_10 = arith.constant 3.200000e+01 : f32
    %17 = vector.broadcast %cst_10 : f32 to vector<8x1xf32>
    %18 = arith.divf %16, %17 : vector<8x1xf32>
    %19 = vector.broadcast %11 : vector<8x1xf32> to vector<8x32xf32>
    %20 = arith.subf %3, %19 : vector<8x32xf32>
    %cst_11 = arith.constant 9.99999997E-7 : f32
    %21 = vector.broadcast %cst_11 : f32 to vector<8x1xf32>
    %22 = arith.addf %18, %21 : vector<8x1xf32>
    %23 = math.rsqrt %22 : vector<8x1xf32>
    %24 = vector.broadcast %23 : vector<8x1xf32> to vector<8x32xf32>
    %25 = arith.mulf %20, %24 : vector<8x32xf32>
    %26 = vector.broadcast %5 : vector<1x32xf32> to vector<8x32xf32>
    %27 = arith.mulf %25, %26 : vector<8x32xf32>
    %28 = vector.broadcast %7 : vector<1x32xf32> to vector<8x32xf32>
    %29 = arith.addf %27, %28 : vector<8x32xf32>
    %c0_12 = arith.constant 0 : index
    %c0_13 = arith.constant 0 : index
    %c0_14 = arith.constant 0 : index
    %30 = vector.load %arg4[%c0_12, %c0_13, %c0_14] : memref<1x32x96xbf16, #tpu.memory_space<vmem>>, vector<1x32x96xbf16>
    %31 = vector.shape_cast %30 : vector<1x32x96xbf16> to vector<32x96xbf16>
    %32 = arith.truncf %29 : vector<8x32xf32> to vector<8x32xbf16>
    %cst_15 = arith.constant dense<0.000000e+00> : vector<8x96xf32>
    %33 = tpu.matmul %32, %31, %cst_15 {dimension_numbers = #tpu.dot_dimension_numbers<[1], [0], [0], [1], [0, 0, 1, 1], [], []>} : vector<8x32xbf16>, vector<32x96xbf16>, vector<8x96xf32> -> vector<8x96xf32>
    %c0_16 = arith.constant 0 : index
    %c0_17 = arith.constant 0 : index
    %c0_18 = arith.constant 0 : index
    %34 = vector.load %arg5[%c0_16, %c0_17, %c0_18] : memref<1x1x96xf32, #tpu.memory_space<vmem>>, vector<1x1x96xf32>
    %35 = vector.shape_cast %34 : vector<1x1x96xf32> to vector<1x96xf32>
    %36 = vector.broadcast %35 : vector<1x96xf32> to vector<8x96xf32>
    %37 = arith.addf %33, %36 : vector<8x96xf32>
    %c0_19 = arith.constant 0 : index
    %c0_20 = arith.constant 0 : index
    %c0_21 = arith.constant 0 : index
    %38 = vector.load %arg3[%c0_19, %c0_20, %c0_21] : memref<1x8x8xf32, #tpu.memory_space<vmem>>, vector<1x8x8xf32>
    %39 = vector.shape_cast %38 : vector<1x8x8xf32> to vector<8x8xf32>
    %40 = vector.extract_strided_slice %37 {offsets = [0, 0], sizes = [8, 8], strides = [1, 1]} : vector<8x96xf32> to vector<8x8xf32>
    %41 = vector.extract_strided_slice %37 {offsets = [0, 32], sizes = [8, 8], strides = [1, 1]} : vector<8x96xf32> to vector<8x8xf32>
    %42 = vector.extract_strided_slice %37 {offsets = [0, 64], sizes = [8, 8], strides = [1, 1]} : vector<8x96xf32> to vector<8x8xf32>
    %43 = tpu.transpose %41, [1, 0] : vector<8x8xf32> -> vector<8x8xf32>
    %44 = arith.truncf %40 : vector<8x8xf32> to vector<8x8xbf16>
    %45 = arith.truncf %43 : vector<8x8xf32> to vector<8x8xbf16>
    %cst_22 = arith.constant dense<0.000000e+00> : vector<8x8xf32>
    %46 = tpu.matmul %44, %45, %cst_22 {dimension_numbers = #tpu.dot_dimension_numbers<[1], [0], [0], [1], [0, 0, 1, 1], [], []>} : vector<8x8xbf16>, vector<8x8xbf16>, vector<8x8xf32> -> vector<8x8xf32>
    %47 = arith.addf %46, %39 : vector<8x8xf32>
    %cst_23 = arith.constant dense<0xFF800000> : vector<8xf32>
    %48 = vector.multi_reduction <maximumf>, %47, %cst_23 [1] : vector<8x8xf32> to vector<8xf32>
    %49 = vector.shape_cast %48 : vector<8xf32> to vector<8x1xf32>
    %50 = vector.broadcast %49 : vector<8x1xf32> to vector<8x8xf32>
    %51 = arith.subf %47, %50 : vector<8x8xf32>
    %52 = math.exp %51 : vector<8x8xf32>
    %cst_24 = arith.constant dense<0.000000e+00> : vector<8xf32>
    %53 = vector.multi_reduction <add>, %52, %cst_24 [1] : vector<8x8xf32> to vector<8xf32>
    %54 = vector.shape_cast %53 : vector<8xf32> to vector<8x1xf32>
    %55 = tpu.reciprocal %54 {approx = true} : vector<8x1xf32> -> vector<8x1xf32>
    %56 = vector.broadcast %55 : vector<8x1xf32> to vector<8x8xf32>
    %57 = arith.mulf %52, %56 : vector<8x8xf32>
    %58 = arith.truncf %57 : vector<8x8xf32> to vector<8x8xbf16>
    %59 = arith.truncf %42 : vector<8x8xf32> to vector<8x8xbf16>
    %cst_25 = arith.constant dense<0.000000e+00> : vector<8x8xf32>
    %60 = tpu.matmul %58, %59, %cst_25 {dimension_numbers = #tpu.dot_dimension_numbers<[1], [0], [0], [1], [0, 0, 1, 1], [], []>} : vector<8x8xbf16>, vector<8x8xbf16>, vector<8x8xf32> -> vector<8x8xf32>
    %c0_26 = arith.constant 0 : index
    %c0_27 = arith.constant 0 : index
    %61 = vector.load %arg26[%c0_26, %c0_27] : memref<8x32xf32, #tpu.memory_space<vmem>>, vector<8x8xf32>
    tpu.vector_store %arg26[%c0_26, %c0_27], %60 {strides = array<i32>} : memref<8x32xf32, #tpu.memory_space<vmem>>, vector<8x8xf32>,
    %62 = vector.extract_strided_slice %37 {offsets = [0, 8], sizes = [8, 8], strides = [1, 1]} : vector<8x96xf32> to vector<8x8xf32>
    %63 = vector.extract_strided_slice %37 {offsets = [0, 40], sizes = [8, 8], strides = [1, 1]} : vector<8x96xf32> to vector<8x8xf32>
    %64 = vector.extract_strided_slice %37 {offsets = [0, 72], sizes = [8, 8], strides = [1, 1]} : vector<8x96xf32> to vector<8x8xf32>
    %65 = tpu.transpose %63, [1, 0] : vector<8x8xf32> -> vector<8x8xf32>
    %66 = arith.truncf %62 : vector<8x8xf32> to vector<8x8xbf16>
    %67 = arith.truncf %65 : vector<8x8xf32> to vector<8x8xbf16>
    %cst_28 = arith.constant dense<0.000000e+00> : vector<8x8xf32>
    %68 = tpu.matmul %66, %67, %cst_28 {dimension_numbers = #tpu.dot_dimension_numbers<[1], [0], [0], [1], [0, 0, 1, 1], [], []>} : vector<8x8xbf16>, vector<8x8xbf16>, vector<8x8xf32> -> vector<8x8xf32>
    %69 = arith.addf %68, %39 : vector<8x8xf32>
    %cst_29 = arith.constant dense<0xFF800000> : vector<8xf32>
    %70 = vector.multi_reduction <maximumf>, %69, %cst_29 [1] : vector<8x8xf32> to vector<8xf32>
    %71 = vector.shape_cast %70 : vector<8xf32> to vector<8x1xf32>
    %72 = vector.broadcast %71 : vector<8x1xf32> to vector<8x8xf32>
    %73 = arith.subf %69, %72 : vector<8x8xf32>
    %74 = math.exp %73 : vector<8x8xf32>
    %cst_30 = arith.constant dense<0.000000e+00> : vector<8xf32>
    %75 = vector.multi_reduction <add>, %74, %cst_30 [1] : vector<8x8xf32> to vector<8xf32>
    %76 = vector.shape_cast %75 : vector<8xf32> to vector<8x1xf32>
    %77 = tpu.reciprocal %76 {approx = true} : vector<8x1xf32> -> vector<8x1xf32>
    %78 = vector.broadcast %77 : vector<8x1xf32> to vector<8x8xf32>
    %79 = arith.mulf %74, %78 : vector<8x8xf32>
    %80 = arith.truncf %79 : vector<8x8xf32> to vector<8x8xbf16>
    %81 = arith.truncf %64 : vector<8x8xf32> to vector<8x8xbf16>
    %cst_31 = arith.constant dense<0.000000e+00> : vector<8x8xf32>
    %82 = tpu.matmul %80, %81, %cst_31 {dimension_numbers = #tpu.dot_dimension_numbers<[1], [0], [0], [1], [0, 0, 1, 1], [], []>} : vector<8x8xbf16>, vector<8x8xbf16>, vector<8x8xf32> -> vector<8x8xf32>
    %c0_32 = arith.constant 0 : index
    %c8 = arith.constant 8 : index
    %83 = vector.load %arg26[%c0_32, %c8] : memref<8x32xf32, #tpu.memory_space<vmem>>, vector<8x8xf32>
    tpu.vector_store %arg26[%c0_32, %c8], %82 {strides = array<i32>} : memref<8x32xf32, #tpu.memory_space<vmem>>, vector<8x8xf32>,
    %84 = vector.extract_strided_slice %37 {offsets = [0, 16], sizes = [8, 8], strides = [1, 1]} : vector<8x96xf32> to vector<8x8xf32>
    %85 = vector.extract_strided_slice %37 {offsets = [0, 48], sizes = [8, 8], strides = [1, 1]} : vector<8x96xf32> to vector<8x8xf32>
    %86 = vector.extract_strided_slice %37 {offsets = [0, 80], sizes = [8, 8], strides = [1, 1]} : vector<8x96xf32> to vector<8x8xf32>
    %87 = tpu.transpose %85, [1, 0] : vector<8x8xf32> -> vector<8x8xf32>
    %88 = arith.truncf %84 : vector<8x8xf32> to vector<8x8xbf16>
    %89 = arith.truncf %87 : vector<8x8xf32> to vector<8x8xbf16>
    %cst_33 = arith.constant dense<0.000000e+00> : vector<8x8xf32>
    %90 = tpu.matmul %88, %89, %cst_33 {dimension_numbers = #tpu.dot_dimension_numbers<[1], [0], [0], [1], [0, 0, 1, 1], [], []>} : vector<8x8xbf16>, vector<8x8xbf16>, vector<8x8xf32> -> vector<8x8xf32>
    %91 = arith.addf %90, %39 : vector<8x8xf32>
    %cst_34 = arith.constant dense<0xFF800000> : vector<8xf32>
    %92 = vector.multi_reduction <maximumf>, %91, %cst_34 [1] : vector<8x8xf32> to vector<8xf32>
    %93 = vector.shape_cast %92 : vector<8xf32> to vector<8x1xf32>
    %94 = vector.broadcast %93 : vector<8x1xf32> to vector<8x8xf32>
    %95 = arith.subf %91, %94 : vector<8x8xf32>
    %96 = math.exp %95 : vector<8x8xf32>
    %cst_35 = arith.constant dense<0.000000e+00> : vector<8xf32>
    %97 = vector.multi_reduction <add>, %96, %cst_35 [1] : vector<8x8xf32> to vector<8xf32>
    %98 = vector.shape_cast %97 : vector<8xf32> to vector<8x1xf32>
    %99 = tpu.reciprocal %98 {approx = true} : vector<8x1xf32> -> vector<8x1xf32>
    %100 = vector.broadcast %99 : vector<8x1xf32> to vector<8x8xf32>
    %101 = arith.mulf %96, %100 : vector<8x8xf32>
    %102 = arith.truncf %101 : vector<8x8xf32> to vector<8x8xbf16>
    %103 = arith.truncf %86 : vector<8x8xf32> to vector<8x8xbf16>
    %cst_36 = arith.constant dense<0.000000e+00> : vector<8x8xf32>
    %104 = tpu.matmul %102, %103, %cst_36 {dimension_numbers = #tpu.dot_dimension_numbers<[1], [0], [0], [1], [0, 0, 1, 1], [], []>} : vector<8x8xbf16>, vector<8x8xbf16>, vector<8x8xf32> -> vector<8x8xf32>
    %c0_37 = arith.constant 0 : index
    %c16 = arith.constant 16 : index
    %105 = vector.load %arg26[%c0_37, %c16] : memref<8x32xf32, #tpu.memory_space<vmem>>, vector<8x8xf32>
    tpu.vector_store %arg26[%c0_37, %c16], %104 {strides = array<i32>} : memref<8x32xf32, #tpu.memory_space<vmem>>, vector<8x8xf32>,
    %106 = vector.extract_strided_slice %37 {offsets = [0, 24], sizes = [8, 8], strides = [1, 1]} : vector<8x96xf32> to vector<8x8xf32>
    %107 = vector.extract_strided_slice %37 {offsets = [0, 56], sizes = [8, 8], strides = [1, 1]} : vector<8x96xf32> to vector<8x8xf32>
    %108 = vector.extract_strided_slice %37 {offsets = [0, 88], sizes = [8, 8], strides = [1, 1]} : vector<8x96xf32> to vector<8x8xf32>
    %109 = tpu.transpose %107, [1, 0] : vector<8x8xf32> -> vector<8x8xf32>
    %110 = arith.truncf %106 : vector<8x8xf32> to vector<8x8xbf16>
    %111 = arith.truncf %109 : vector<8x8xf32> to vector<8x8xbf16>
    %cst_38 = arith.constant dense<0.000000e+00> : vector<8x8xf32>
    %112 = tpu.matmul %110, %111, %cst_38 {dimension_numbers = #tpu.dot_dimension_numbers<[1], [0], [0], [1], [0, 0, 1, 1], [], []>} : vector<8x8xbf16>, vector<8x8xbf16>, vector<8x8xf32> -> vector<8x8xf32>
    %113 = arith.addf %112, %39 : vector<8x8xf32>
    %cst_39 = arith.constant dense<0xFF800000> : vector<8xf32>
    %114 = vector.multi_reduction <maximumf>, %113, %cst_39 [1] : vector<8x8xf32> to vector<8xf32>
    %115 = vector.shape_cast %114 : vector<8xf32> to vector<8x1xf32>
    %116 = vector.broadcast %115 : vector<8x1xf32> to vector<8x8xf32>
    %117 = arith.subf %113, %116 : vector<8x8xf32>
    %118 = math.exp %117 : vector<8x8xf32>
    %cst_40 = arith.constant dense<0.000000e+00> : vector<8xf32>
    %119 = vector.multi_reduction <add>, %118, %cst_40 [1] : vector<8x8xf32> to vector<8xf32>
    %120 = vector.shape_cast %119 : vector<8xf32> to vector<8x1xf32>
    %121 = tpu.reciprocal %120 {approx = true} : vector<8x1xf32> -> vector<8x1xf32>
    %122 = vector.broadcast %121 : vector<8x1xf32> to vector<8x8xf32>
    %123 = arith.mulf %118, %122 : vector<8x8xf32>
    %124 = arith.truncf %123 : vector<8x8xf32> to vector<8x8xbf16>
    %125 = arith.truncf %108 : vector<8x8xf32> to vector<8x8xbf16>
    %cst_41 = arith.constant dense<0.000000e+00> : vector<8x8xf32>
    %126 = tpu.matmul %124, %125, %cst_41 {dimension_numbers = #tpu.dot_dimension_numbers<[1], [0], [0], [1], [0, 0, 1, 1], [], []>} : vector<8x8xbf16>, vector<8x8xbf16>, vector<8x8xf32> -> vector<8x8xf32>
    %c0_42 = arith.constant 0 : index
    %c24 = arith.constant 24 : index
    %127 = vector.load %arg26[%c0_42, %c24] : memref<8x32xf32, #tpu.memory_space<vmem>>, vector<8x8xf32>
    tpu.vector_store %arg26[%c0_42, %c24], %126 {strides = array<i32>} : memref<8x32xf32, #tpu.memory_space<vmem>>, vector<8x8xf32>,
    %c0_43 = arith.constant 0 : index
    %c0_44 = arith.constant 0 : index
    %128 = vector.load %arg26[%c0_43, %c0_44] : memref<8x32xf32, #tpu.memory_space<vmem>>, vector<8x32xf32>
    %c0_45 = arith.constant 0 : index
    %c0_46 = arith.constant 0 : index
    %c0_47 = arith.constant 0 : index
    %129 = vector.load %arg6[%c0_45, %c0_46, %c0_47] : memref<1x32x32xbf16, #tpu.memory_space<vmem>>, vector<1x32x32xbf16>
    %130 = vector.shape_cast %129 : vector<1x32x32xbf16> to vector<32x32xbf16>
    %131 = arith.truncf %128 : vector<8x32xf32> to vector<8x32xbf16>
    %cst_48 = arith.constant dense<0.000000e+00> : vector<8x32xf32>
    %132 = tpu.matmul %131, %130, %cst_48 {dimension_numbers = #tpu.dot_dimension_numbers<[1], [0], [0], [1], [0, 0, 1, 1], [], []>} : vector<8x32xbf16>, vector<32x32xbf16>, vector<8x32xf32> -> vector<8x32xf32>
    %c0_49 = arith.constant 0 : index
    %c0_50 = arith.constant 0 : index
    %c0_51 = arith.constant 0 : index
    %133 = vector.load %arg7[%c0_49, %c0_50, %c0_51] : memref<1x1x32xf32, #tpu.memory_space<vmem>>, vector<1x1x32xf32>
    %134 = vector.shape_cast %133 : vector<1x1x32xf32> to vector<1x32xf32>
    %135 = vector.broadcast %134 : vector<1x32xf32> to vector<8x32xf32>
    %136 = arith.addf %132, %135 : vector<8x32xf32>
    %137 = arith.addf %29, %136 : vector<8x32xf32>
    %c0_52 = arith.constant 0 : index
    %c0_53 = arith.constant 0 : index
    %c0_54 = arith.constant 0 : index
    %138 = vector.load %arg10[%c0_52, %c0_53, %c0_54] : memref<1x1x32xf32, #tpu.memory_space<vmem>>, vector<1x1x32xf32>
    %139 = vector.shape_cast %138 : vector<1x1x32xf32> to vector<1x32xf32>
    %c0_55 = arith.constant 0 : index
    %c0_56 = arith.constant 0 : index
    %c0_57 = arith.constant 0 : index
    %140 = vector.load %arg11[%c0_55, %c0_56, %c0_57] : memref<1x1x32xf32, #tpu.memory_space<vmem>>, vector<1x1x32xf32>
    %141 = vector.shape_cast %140 : vector<1x1x32xf32> to vector<1x32xf32>
    %cst_58 = arith.constant dense<0.000000e+00> : vector<8xf32>
    %142 = vector.multi_reduction <add>, %137, %cst_58 [1] : vector<8x32xf32> to vector<8xf32>
    %143 = vector.shape_cast %142 : vector<8xf32> to vector<8x1xf32>
    %cst_59 = arith.constant 3.200000e+01 : f32
    %144 = vector.broadcast %cst_59 : f32 to vector<8x1xf32>
    %145 = arith.divf %143, %144 : vector<8x1xf32>
    %146 = vector.broadcast %145 : vector<8x1xf32> to vector<8x32xf32>
    %147 = arith.subf %137, %146 : vector<8x32xf32>
    %148 = arith.mulf %147, %147 : vector<8x32xf32>
    %cst_60 = arith.constant dense<0.000000e+00> : vector<8xf32>
    %149 = vector.multi_reduction <add>, %148, %cst_60 [1] : vector<8x32xf32> to vector<8xf32>
    %150 = vector.shape_cast %149 : vector<8xf32> to vector<8x1xf32>
    %cst_61 = arith.constant 3.200000e+01 : f32
    %151 = vector.broadcast %cst_61 : f32 to vector<8x1xf32>
    %152 = arith.divf %150, %151 : vector<8x1xf32>
    %153 = vector.broadcast %145 : vector<8x1xf32> to vector<8x32xf32>
    %154 = arith.subf %137, %153 : vector<8x32xf32>
    %cst_62 = arith.constant 9.99999997E-7 : f32
    %155 = vector.broadcast %cst_62 : f32 to vector<8x1xf32>
    %156 = arith.addf %152, %155 : vector<8x1xf32>
    %157 = math.rsqrt %156 : vector<8x1xf32>
    %158 = vector.broadcast %157 : vector<8x1xf32> to vector<8x32xf32>
    %159 = arith.mulf %154, %158 : vector<8x32xf32>
    %160 = vector.broadcast %139 : vector<1x32xf32> to vector<8x32xf32>
    %161 = arith.mulf %159, %160 : vector<8x32xf32>
    %162 = vector.broadcast %141 : vector<1x32xf32> to vector<8x32xf32>
    %163 = arith.addf %161, %162 : vector<8x32xf32>
    %c0_63 = arith.constant 0 : index
    %c0_64 = arith.constant 0 : index
    %c0_65 = arith.constant 0 : index
    %164 = vector.load %arg12[%c0_63, %c0_64, %c0_65] : memref<1x32x64xbf16, #tpu.memory_space<vmem>>, vector<1x32x64xbf16>
    %165 = vector.shape_cast %164 : vector<1x32x64xbf16> to vector<32x64xbf16>
    %166 = arith.truncf %163 : vector<8x32xf32> to vector<8x32xbf16>
    %cst_66 = arith.constant dense<0.000000e+00> : vector<8x64xf32>
    %167 = tpu.matmul %166, %165, %cst_66 {dimension_numbers = #tpu.dot_dimension_numbers<[1], [0], [0], [1], [0, 0, 1, 1], [], []>} : vector<8x32xbf16>, vector<32x64xbf16>, vector<8x64xf32> -> vector<8x64xf32>
    %c0_67 = arith.constant 0 : index
    %c0_68 = arith.constant 0 : index
    %c0_69 = arith.constant 0 : index
    %168 = vector.load %arg13[%c0_67, %c0_68, %c0_69] : memref<1x1x64xf32, #tpu.memory_space<vmem>>, vector<1x1x64xf32>
    %169 = vector.shape_cast %168 : vector<1x1x64xf32> to vector<1x64xf32>
    %170 = vector.broadcast %169 : vector<1x64xf32> to vector<8x64xf32>
    %171 = arith.addf %167, %170 : vector<8x64xf32>
    %cst_70 = arith.constant 5.000000e-01 : f32
    %172 = vector.broadcast %cst_70 : f32 to vector<8x64xf32>
    %173 = arith.mulf %172, %171 : vector<8x64xf32>
    %cst_71 = arith.constant 4.471500e-02 : f32
    %174 = vector.broadcast %cst_71 : f32 to vector<8x64xf32>
    %175 = arith.mulf %174, %171 : vector<8x64xf32>
    %176 = arith.mulf %175, %171 : vector<8x64xf32>
    %177 = arith.mulf %176, %171 : vector<8x64xf32>
    %178 = arith.addf %171, %177 : vector<8x64xf32>
    %cst_72 = arith.constant 0.797884583 : f32
    %179 = vector.broadcast %cst_72 : f32 to vector<8x64xf32>
    %180 = arith.mulf %179, %178 : vector<8x64xf32>
    %181 = math.tanh %180 : vector<8x64xf32>
    %cst_73 = arith.constant 1.000000e+00 : f32
    %182 = vector.broadcast %cst_73 : f32 to vector<8x64xf32>
    %183 = arith.addf %182, %181 : vector<8x64xf32>
    %184 = arith.mulf %173, %183 : vector<8x64xf32>
    %c0_74 = arith.constant 0 : index
    %c0_75 = arith.constant 0 : index
    %c0_76 = arith.constant 0 : index
    %185 = vector.load %arg14[%c0_74, %c0_75, %c0_76] : memref<1x64x32xbf16, #tpu.memory_space<vmem>>, vector<1x64x32xbf16>
    %186 = vector.shape_cast %185 : vector<1x64x32xbf16> to vector<64x32xbf16>
    %187 = arith.truncf %184 : vector<8x64xf32> to vector<8x64xbf16>
    %cst_77 = arith.constant dense<0.000000e+00> : vector<8x32xf32>
    %188 = tpu.matmul %187, %186, %cst_77 {dimension_numbers = #tpu.dot_dimension_numbers<[1], [0], [0], [1], [0, 0, 1, 1], [], []>} : vector<8x64xbf16>, vector<64x32xbf16>, vector<8x32xf32> -> vector<8x32xf32>
    %c0_78 = arith.constant 0 : index
    %c0_79 = arith.constant 0 : index
    %c0_80 = arith.constant 0 : index
    %189 = vector.load %arg15[%c0_78, %c0_79, %c0_80] : memref<1x1x32xf32, #tpu.memory_space<vmem>>, vector<1x1x32xf32>
    %190 = vector.shape_cast %189 : vector<1x1x32xf32> to vector<1x32xf32>
    %191 = vector.broadcast %190 : vector<1x32xf32> to vector<8x32xf32>
    %192 = arith.addf %188, %191 : vector<8x32xf32>
    %193 = arith.addf %163, %192 : vector<8x32xf32>
    %c0_81 = arith.constant 0 : index
    %c0_82 = arith.constant 0 : index
    %c0_83 = arith.constant 0 : index
    %194 = vector.load %arg16[%c0_81, %c0_82, %c0_83] : memref<1x1x32xf32, #tpu.memory_space<vmem>>, vector<1x1x32xf32>
    %195 = vector.shape_cast %194 : vector<1x1x32xf32> to vector<1x32xf32>
    %c0_84 = arith.constant 0 : index
    %c0_85 = arith.constant 0 : index
    %c0_86 = arith.constant 0 : index
    %196 = vector.load %arg17[%c0_84, %c0_85, %c0_86] : memref<1x1x32xf32, #tpu.memory_space<vmem>>, vector<1x1x32xf32>
    %197 = vector.shape_cast %196 : vector<1x1x32xf32> to vector<1x32xf32>
    %cst_87 = arith.constant dense<0.000000e+00> : vector<8xf32>
    %198 = vector.multi_reduction <add>, %193, %cst_87 [1] : vector<8x32xf32> to vector<8xf32>
    %199 = vector.shape_cast %198 : vector<8xf32> to vector<8x1xf32>
    %cst_88 = arith.constant 3.200000e+01 : f32
    %200 = vector.broadcast %cst_88 : f32 to vector<8x1xf32>
    %201 = arith.divf %199, %200 : vector<8x1xf32>
    %202 = vector.broadcast %201 : vector<8x1xf32> to vector<8x32xf32>
    %203 = arith.subf %193, %202 : vector<8x32xf32>
    %204 = arith.mulf %203, %203 : vector<8x32xf32>
    %cst_89 = arith.constant dense<0.000000e+00> : vector<8xf32>
    %205 = vector.multi_reduction <add>, %204, %cst_89 [1] : vector<8x32xf32> to vector<8xf32>
    %206 = vector.shape_cast %205 : vector<8xf32> to vector<8x1xf32>
    %cst_90 = arith.constant 3.200000e+01 : f32
    %207 = vector.broadcast %cst_90 : f32 to vector<8x1xf32>
    %208 = arith.divf %206, %207 : vector<8x1xf32>
    %209 = vector.broadcast %201 : vector<8x1xf32> to vector<8x32xf32>
    %210 = arith.subf %193, %209 : vector<8x32xf32>
    %cst_91 = arith.constant 9.99999997E-7 : f32
    %211 = vector.broadcast %cst_91 : f32 to vector<8x1xf32>
    %212 = arith.addf %208, %211 : vector<8x1xf32>
    %213 = math.rsqrt %212 : vector<8x1xf32>
    %214 = vector.broadcast %213 : vector<8x1xf32> to vector<8x32xf32>
    %215 = arith.mulf %210, %214 : vector<8x32xf32>
    %216 = vector.broadcast %195 : vector<1x32xf32> to vector<8x32xf32>
    %217 = arith.mulf %215, %216 : vector<8x32xf32>
    %218 = vector.broadcast %197 : vector<1x32xf32> to vector<8x32xf32>
    %219 = arith.addf %217, %218 : vector<8x32xf32>
    %c0_92 = arith.constant 0 : index
    %c0_93 = arith.constant 0 : index
    %220 = vector.load %arg25[%c0_92, %c0_93] : memref<8x32xf32, #tpu.memory_space<vmem>>, vector<8x32xf32>
    tpu.vector_store %arg25[%c0_92, %c0_93], %219 {strides = array<i32>} : memref<8x32xf32, #tpu.memory_space<vmem>>, vector<8x32xf32>,
    %c1_i32 = arith.constant 1 : i32
    %221 = arith.cmpi eq, %arg1, %c1_i32 : i32
    %222 = arith.extui %221 : i1 to i32
    %c0_i32_94 = arith.constant 0 : i32
    %223 = arith.cmpi ne, %222, %c0_i32_94 : i32
    scf.if %223 {
      "tpu.region"() ({
        %274 = tpu.sem_alloc : memref<!tpu.dma_semaphore, #tpu.memory_space<semaphore_mem>>
        tpu.enqueue_dma source(%arg18 : memref<32x32xbf16, #tpu.memory_space<any>>) target(%arg27 : memref<32x32xbf16, #tpu.memory_space<vmem>>) target_semaphore(%274 : memref<!tpu.dma_semaphore, #tpu.memory_space<semaphore_mem>>)
        tpu.wait_dma2 semaphore(%274 : memref<!tpu.dma_semaphore, #tpu.memory_space<semaphore_mem>>) src(%arg18 : memref<32x32xbf16, #tpu.memory_space<any>>) dst(%arg27 : memref<32x32xbf16, #tpu.memory_space<vmem>>)
        tpu.yield
      }) : () -> ()
      "tpu.region"() ({
        %274 = tpu.sem_alloc : memref<!tpu.dma_semaphore, #tpu.memory_space<semaphore_mem>>
        tpu.enqueue_dma source(%arg22 : memref<32x128xbf16, #tpu.memory_space<any>>) target(%arg28 : memref<32x128xbf16, #tpu.memory_space<vmem>>) target_semaphore(%274 : memref<!tpu.dma_semaphore, #tpu.memory_space<semaphore_mem>>)
        tpu.wait_dma2 semaphore(%274 : memref<!tpu.dma_semaphore, #tpu.memory_space<semaphore_mem>>) src(%arg22 : memref<32x128xbf16, #tpu.memory_space<any>>) dst(%arg28 : memref<32x128xbf16, #tpu.memory_space<vmem>>)
        tpu.yield
      }) : () -> ()
      %c0_95 = arith.constant 0 : index
      %c0_96 = arith.constant 0 : index
      %224 = vector.load %arg27[%c0_95, %c0_96] : memref<32x32xbf16, #tpu.memory_space<vmem>>, vector<32x32xbf16>
      %225 = arith.truncf %219 : vector<8x32xf32> to vector<8x32xbf16>
      %cst_97 = arith.constant dense<0.000000e+00> : vector<8x32xf32>
      %226 = tpu.matmul %225, %224, %cst_97 {dimension_numbers = #tpu.dot_dimension_numbers<[1], [0], [0], [1], [0, 0, 1, 1], [], []>} : vector<8x32xbf16>, vector<32x32xbf16>, vector<8x32xf32> -> vector<8x32xf32>
      %c0_98 = arith.constant 0 : index
      %c0_99 = arith.constant 0 : index
      %227 = vector.load %arg19[%c0_98, %c0_99] : memref<1x32xf32, #tpu.memory_space<vmem>>, vector<1x32xf32>
      %228 = vector.broadcast %227 : vector<1x32xf32> to vector<8x32xf32>
      %229 = arith.addf %226, %228 : vector<8x32xf32>
      %cst_100 = arith.constant 5.000000e-01 : f32
      %230 = vector.broadcast %cst_100 : f32 to vector<8x32xf32>
      %231 = arith.mulf %230, %229 : vector<8x32xf32>
      %cst_101 = arith.constant 4.471500e-02 : f32
      %232 = vector.broadcast %cst_101 : f32 to vector<8x32xf32>
      %233 = arith.mulf %232, %229 : vector<8x32xf32>
      %234 = arith.mulf %233, %229 : vector<8x32xf32>
      %235 = arith.mulf %234, %229 : vector<8x32xf32>
      %236 = arith.addf %229, %235 : vector<8x32xf32>
      %cst_102 = arith.constant 0.797884583 : f32
      %237 = vector.broadcast %cst_102 : f32 to vector<8x32xf32>
      %238 = arith.mulf %237, %236 : vector<8x32xf32>
      %239 = math.tanh %238 : vector<8x32xf32>
      %cst_103 = arith.constant 1.000000e+00 : f32
      %240 = vector.broadcast %cst_103 : f32 to vector<8x32xf32>
      %241 = arith.addf %240, %239 : vector<8x32xf32>
      %242 = arith.mulf %231, %241 : vector<8x32xf32>
      %c0_104 = arith.constant 0 : index
      %c0_105 = arith.constant 0 : index
      %243 = vector.load %arg20[%c0_104, %c0_105] : memref<1x32xf32, #tpu.memory_space<vmem>>, vector<1x32xf32>
      %c0_106 = arith.constant 0 : index
      %c0_107 = arith.constant 0 : index
      %244 = vector.load %arg21[%c0_106, %c0_107] : memref<1x32xf32, #tpu.memory_space<vmem>>, vector<1x32xf32>
      %cst_108 = arith.constant dense<0.000000e+00> : vector<8xf32>
      %245 = vector.multi_reduction <add>, %242, %cst_108 [1] : vector<8x32xf32> to vector<8xf32>
      %246 = vector.shape_cast %245 : vector<8xf32> to vector<8x1xf32>
      %cst_109 = arith.constant 3.200000e+01 : f32
      %247 = vector.broadcast %cst_109 : f32 to vector<8x1xf32>
      %248 = arith.divf %246, %247 : vector<8x1xf32>
      %249 = vector.broadcast %248 : vector<8x1xf32> to vector<8x32xf32>
      %250 = arith.subf %242, %249 : vector<8x32xf32>
      %251 = arith.mulf %250, %250 : vector<8x32xf32>
      %cst_110 = arith.constant dense<0.000000e+00> : vector<8xf32>
      %252 = vector.multi_reduction <add>, %251, %cst_110 [1] : vector<8x32xf32> to vector<8xf32>
      %253 = vector.shape_cast %252 : vector<8xf32> to vector<8x1xf32>
      %cst_111 = arith.constant 3.200000e+01 : f32
      %254 = vector.broadcast %cst_111 : f32 to vector<8x1xf32>
      %255 = arith.divf %253, %254 : vector<8x1xf32>
      %256 = vector.broadcast %248 : vector<8x1xf32> to vector<8x32xf32>
      %257 = arith.subf %242, %256 : vector<8x32xf32>
      %cst_112 = arith.constant 9.99999997E-7 : f32
      %258 = vector.broadcast %cst_112 : f32 to vector<8x1xf32>
      %259 = arith.addf %255, %258 : vector<8x1xf32>
      %260 = math.rsqrt %259 : vector<8x1xf32>
      %261 = vector.broadcast %260 : vector<8x1xf32> to vector<8x32xf32>
      %262 = arith.mulf %257, %261 : vector<8x32xf32>
      %263 = vector.broadcast %243 : vector<1x32xf32> to vector<8x32xf32>
      %264 = arith.mulf %262, %263 : vector<8x32xf32>
      %265 = vector.broadcast %244 : vector<1x32xf32> to vector<8x32xf32>
      %266 = arith.addf %264, %265 : vector<8x32xf32>
      %c0_113 = arith.constant 0 : index
      %c0_114 = arith.constant 0 : index
      %267 = vector.load %arg28[%c0_113, %c0_114] : memref<32x128xbf16, #tpu.memory_space<vmem>>, vector<32x128xbf16>
      %268 = arith.truncf %266 : vector<8x32xf32> to vector<8x32xbf16>
      %cst_115 = arith.constant dense<0.000000e+00> : vector<8x128xf32>
      %269 = tpu.matmul %268, %267, %cst_115 {dimension_numbers = #tpu.dot_dimension_numbers<[1], [0], [0], [1], [0, 0, 1, 1], [], []>} : vector<8x32xbf16>, vector<32x128xbf16>, vector<8x128xf32> -> vector<8x128xf32>
      %c0_116 = arith.constant 0 : index
      %c0_117 = arith.constant 0 : index
      %270 = vector.load %arg23[%c0_116, %c0_117] : memref<1x128xf32, #tpu.memory_space<vmem>>, vector<1x128xf32>
      %271 = vector.broadcast %270 : vector<1x128xf32> to vector<8x128xf32>
      %272 = arith.addf %269, %271 : vector<8x128xf32>
      %c0_118 = arith.constant 0 : index
      %c0_119 = arith.constant 0 : index
      %273 = vector.load %arg24[%c0_118, %c0_119] : memref<8x128xf32, #tpu.memory_space<vmem>>, vector<8x128xf32>
      tpu.vector_store %arg24[%c0_118, %c0_119], %272 {strides = array<i32>} : memref<8x128xf32, #tpu.memory_space<vmem>>, vector<8x128xf32>,
    } else {
    }
    return
  }
  func.func @transform_0(%arg0: i32, %arg1: i32) -> (i32, i32) {
    %c0_i32 = arith.constant 0 : i32
    %c0_i32_0 = arith.constant 0 : i32
    return %arg0, %c0_i32 : i32, i32
  }
  func.func @transform_1(%arg0: i32, %arg1: i32) -> (i32, i32, i32) {
    %c0_i32 = arith.constant 0 : i32
    %c0_i32_0 = arith.constant 0 : i32
    %c0_i32_1 = arith.constant 0 : i32
    return %arg0, %c0_i32, %c0_i32_0 : i32, i32, i32
  }
  func.func @transform_2(%arg0: i32, %arg1: i32) -> (i32, i32, i32) {
    %c0_i32 = arith.constant 0 : i32
    %c0_i32_0 = arith.constant 0 : i32
    %c0_i32_1 = arith.constant 0 : i32
    return %arg1, %c0_i32, %c0_i32_0 : i32, i32, i32
  }
  func.func @transform_3(%arg0: i32, %arg1: i32) -> (i32, i32, i32) {
    %c0_i32 = arith.constant 0 : i32
    %c0_i32_0 = arith.constant 0 : i32
    %c0_i32_1 = arith.constant 0 : i32
    return %arg1, %c0_i32, %c0_i32_0 : i32, i32, i32
  }
  func.func @transform_4(%arg0: i32, %arg1: i32) -> (i32, i32, i32) {
    %c0_i32 = arith.constant 0 : i32
    %c0_i32_0 = arith.constant 0 : i32
    %c0_i32_1 = arith.constant 0 : i32
    return %arg1, %c0_i32, %c0_i32_0 : i32, i32, i32
  }
  func.func @transform_5(%arg0: i32, %arg1: i32) -> (i32, i32, i32) {
    %c0_i32 = arith.constant 0 : i32
    %c0_i32_0 = arith.constant 0 : i32
    %c0_i32_1 = arith.constant 0 : i32
    return %arg1, %c0_i32, %c0_i32_0 : i32, i32, i32
  }
  func.func @transform_6(%arg0: i32, %arg1: i32) -> (i32, i32, i32) {
    %c0_i32 = arith.constant 0 : i32
    %c0_i32_0 = arith.constant 0 : i32
    %c0_i32_1 = arith.constant 0 : i32
    return %arg1, %c0_i32, %c0_i32_0 : i32, i32, i32
  }
  func.func @transform_7(%arg0: i32, %arg1: i32) -> (i32, i32, i32) {
    %c0_i32 = arith.constant 0 : i32
    %c0_i32_0 = arith.constant 0 : i32
    %c0_i32_1 = arith.constant 0 : i32
    return %arg1, %c0_i32, %c0_i32_0 : i32, i32, i32
  }
  func.func @transform_8(%arg0: i32, %arg1: i32) -> (i32, i32, i32) {
    %c0_i32 = arith.constant 0 : i32
    %c0_i32_0 = arith.constant 0 : i32
    %c0_i32_1 = arith.constant 0 : i32
    return %arg1, %c0_i32, %c0_i32_0 : i32, i32, i32
  }
  func.func @transform_9(%arg0: i32, %arg1: i32) -> (i32, i32, i32) {
    %c0_i32 = arith.constant 0 : i32
    %c0_i32_0 = arith.constant 0 : i32
    %c0_i32_1 = arith.constant 0 : i32
    return %arg1, %c0_i32, %c0_i32_0 : i32, i32, i32
  }
  func.func @transform_10(%arg0: i32, %arg1: i32) -> (i32, i32, i32) {
    %c0_i32 = arith.constant 0 : i32
    %c0_i32_0 = arith.constant 0 : i32
    %c0_i32_1 = arith.constant 0 : i32
    return %arg1, %c0_i32, %c0_i32_0 : i32, i32, i32
  }
  func.func @transform_11(%arg0: i32, %arg1: i32) -> (i32, i32, i32) {
    %c0_i32 = arith.constant 0 : i32
    %c0_i32_0 = arith.constant 0 : i32
    %c0_i32_1 = arith.constant 0 : i32
    return %arg1, %c0_i32, %c0_i32_0 : i32, i32, i32
  }
  func.func @transform_12(%arg0: i32, %arg1: i32) -> (i32, i32, i32) {
    %c0_i32 = arith.constant 0 : i32
    %c0_i32_0 = arith.constant 0 : i32
    %c0_i32_1 = arith.constant 0 : i32
    return %arg1, %c0_i32, %c0_i32_0 : i32, i32, i32
  }
  func.func @transform_13(%arg0: i32, %arg1: i32) -> (i32, i32, i32) {
    %c0_i32 = arith.constant 0 : i32
    %c0_i32_0 = arith.constant 0 : i32
    %c0_i32_1 = arith.constant 0 : i32
    return %arg1, %c0_i32, %c0_i32_0 : i32, i32, i32
  }
  func.func @transform_14(%arg0: i32, %arg1: i32) -> (i32, i32, i32) {
    %c0_i32 = arith.constant 0 : i32
    %c0_i32_0 = arith.constant 0 : i32
    %c0_i32_1 = arith.constant 0 : i32
    return %arg1, %c0_i32, %c0_i32_0 : i32, i32, i32
  }
  func.func @transform_15(%arg0: i32, %arg1: i32) -> (i32, i32, i32) {
    %c0_i32 = arith.constant 0 : i32
    %c0_i32_0 = arith.constant 0 : i32
    %c0_i32_1 = arith.constant 0 : i32
    return %arg1, %c0_i32, %c0_i32_0 : i32, i32, i32
  }
  func.func @transform_17(%arg0: i32, %arg1: i32) -> (i32, i32) {
    %c0_i32 = arith.constant 0 : i32
    %c0_i32_0 = arith.constant 0 : i32
    %c0_i32_1 = arith.constant 0 : i32
    return %c0_i32, %c0_i32_0 : i32, i32
  }
  func.func @transform_18(%arg0: i32, %arg1: i32) -> (i32, i32) {
    %c0_i32 = arith.constant 0 : i32
    %c0_i32_0 = arith.constant 0 : i32
    %c0_i32_1 = arith.constant 0 : i32
    return %c0_i32, %c0_i32_0 : i32, i32
  }
  func.func @transform_19(%arg0: i32, %arg1: i32) -> (i32, i32) {
    %c0_i32 = arith.constant 0 : i32
    %c0_i32_0 = arith.constant 0 : i32
    %c0_i32_1 = arith.constant 0 : i32
    return %c0_i32, %c0_i32_0 : i32, i32
  }
  func.func @transform_21(%arg0: i32, %arg1: i32) -> (i32, i32) {
    %c0_i32 = arith.constant 0 : i32
    %c0_i32_0 = arith.constant 0 : i32
    %c0_i32_1 = arith.constant 0 : i32
    return %c0_i32, %c0_i32_0 : i32, i32
  }
  func.func @transform_22(%arg0: i32, %arg1: i32) -> (i32, i32) {
    %c0_i32 = arith.constant 0 : i32
    %c0_i32_0 = arith.constant 0 : i32
    return %arg0, %c0_i32 : i32, i32
  }
}

</mosaic_0001>

<llo_original>
// kernel: bert_forward.1
$region0: #{bert_forward.1}
  #allocation0 [shape = 'u32[]', space=smem, size = 0x4, offset = 0x4, fixed_abs, tag = 'smem constant byte address 0x4 - core index']
  #allocation1 [shape = 'u32[72,128]{1,0:T(1,128)}', space=vmem, size = 0x9000, scoped, tag = 'internal scratch']
  #allocation2 [shape = 'f32[8,32]{1,0:T(8,128)}', space=vmem, size = 0x1000, scoped, tag = 'scratch operand']
  #allocation3 [shape = 'f32[8,32]{1,0:T(8,128)}', space=vmem, size = 0x1000, scoped, tag = 'scratch operand']
  #allocation4 [shape = 'bf16[32,32]{1,0:T(8,128)(2,1)}', space=vmem, size = 0x2000, scoped, tag = 'scratch operand']
  #allocation5 [shape = 'bf16[32,128]{1,0:T(8,128)(2,1)}', space=vmem, size = 0x2000, scoped, tag = 'scratch operand']
  #allocation9 [shape = 's32[]', space=sflag, size = 0x4, offset = 0, fixed_abs, tag = 'sflag constant byte address 0x0 - dummy sync flag']
  #allocation11 [shape = 's32[]', space=sflag, size = 0x4, offset = 0, fixed_abs, tag = 'sflag constant byte address 0x0 - dummy sync flag']
  %s0 = inlined_call_operand.vmem [shape: f32[16,32], index: 0, kind: input, shape index: {}]
  %s1 = inlined_call_operand.vmem [shape: f32[2,8,8], index: 1, kind: input, shape index: {}]
  %s2 = inlined_call_operand.vmem [shape: bf16[2,32,96], index: 2, kind: input, shape index: {}]
  %s3 = inlined_call_operand.vmem [shape: f32[2,1,96], index: 3, kind: input, shape index: {}]
  %s4 = inlined_call_operand.vmem [shape: bf16[2,32,32], index: 4, kind: input, shape index: {}]
  %s5 = inlined_call_operand.vmem [shape: f32[2,1,32], index: 5, kind: input, shape index: {}]
  %s6 = inlined_call_operand.vmem [shape: f32[2,1,32], index: 6, kind: input, shape index: {}]
  %s7 = inlined_call_operand.vmem [shape: f32[2,1,32], index: 7, kind: input, shape index: {}]
  %s8 = inlined_call_operand.vmem [shape: f32[2,1,32], index: 8, kind: input, shape index: {}]
  %s9 = inlined_call_operand.vmem [shape: f32[2,1,32], index: 9, kind: input, shape index: {}]
  %s10 = inlined_call_operand.vmem [shape: bf16[2,32,64], index: 10, kind: input, shape index: {}]
  %s11 = inlined_call_operand.vmem [shape: f32[2,1,64], index: 11, kind: input, shape index: {}]
  %s12 = inlined_call_operand.vmem [shape: bf16[2,64,32], index: 12, kind: input, shape index: {}]
  %s13 = inlined_call_operand.vmem [shape: f32[2,1,32], index: 13, kind: input, shape index: {}]
  %s14 = inlined_call_operand.vmem [shape: f32[2,1,32], index: 14, kind: input, shape index: {}]
  %s15 = inlined_call_operand.vmem [shape: f32[2,1,32], index: 15, kind: input, shape index: {}]
  %s16 = inlined_call_operand.vmem [shape: bf16[32,32], index: 16, kind: input, shape index: {}]
  %s17 = inlined_call_operand.vmem [shape: f32[1,32], index: 17, kind: input, shape index: {}]
  %s18 = inlined_call_operand.vmem [shape: f32[1,32], index: 18, kind: input, shape index: {}]
  %s19 = inlined_call_operand.vmem [shape: f32[1,32], index: 19, kind: input, shape index: {}]
  %s20 = inlined_call_operand.vmem [shape: bf16[32,128], index: 20, kind: input, shape index: {}]
  %s21 = inlined_call_operand.vmem [shape: f32[1,128], index: 21, kind: input, shape index: {}]
  %s22 = inlined_call_operand.hbm [shape: f32[16,128], index: 22, kind: output, shape index: {}]
  %s23 = sld [smem:[#allocation0]]
  $region161: #{bert_forward.1} parent=0
    _
  %s25 = ssub.s32 1, %s23
  %s26 = scalar_select 0, %s25, %s23
  $region1: #{bert_forward.1} parent=0
    #allocation6 [shape = 'u8[8192]{0}', space=vmem, size = 0x2000, scoped, tag = 'output window, operand 0']
    #allocation7 [shape = 's32[2]{0}', space=sflag, size = 0x8, scoped, tag = 'scoped memory for bert_forward.1']
    %27 = vsyncpa [#allocation7], 0
    %s28 = scalar_lea.sflag [#allocation7], 1
    %29 = vsyncpa %s28, 0
    loop: start=0, step=1, limit=6
    $region2: #{bert_forward.1} parent=1 // loop_pre_header
      _
    $region3: #{bert_forward.1} parent=1 // loop_header
      %s31 = sphi 0, %s35
      %p32 = scmp.ge.s32.totalorder %s31, 6
      %s38 = sphi 0, %s50
      %s39 = sphi 0, %s46
      %s40 = sphi 0, %s38
      %s41 = sphi 0, %s39
      %s42 = sphi 0, %s40
      %s43 = sphi 0, %s41
      %s53 = sphi 0, %s55
      %s56 = sphi 0, %s53
      %s57 = sphi 0, %s56
      %s73 = sphi 0, %s57
      %s79 = sphi 0, %s81
      %s82 = sphi 0, %s79
      %s83 = sphi 0, %s82
      %s99 = sphi 0, %s83
      %s105 = sphi 0, %s107
      %s108 = sphi 0, %s105
      %s109 = sphi 0, %s108
      %s125 = sphi 0, %s109
      %s131 = sphi 0, %s133
      %s134 = sphi 0, %s131
      %s135 = sphi 0, %s134
      %s151 = sphi 0, %s135
      %s157 = sphi 0, %s159
      %s160 = sphi 0, %s157
      %s161 = sphi 0, %s160
      %s177 = sphi 0, %s161
      %s183 = sphi 0, %s185
      %s186 = sphi 0, %s183
      %s187 = sphi 0, %s186
      %s203 = sphi 0, %s187
      %s209 = sphi 0, %s211
      %s212 = sphi 0, %s209
      %s213 = sphi 0, %s212
      %s229 = sphi 0, %s213
      %s235 = sphi 0, %s237
      %s238 = sphi 0, %s235
      %s239 = sphi 0, %s238
      %s255 = sphi 0, %s239
      %s261 = sphi 0, %s263
      %s264 = sphi 0, %s261
      %s265 = sphi 0, %s264
      %s281 = sphi 0, %s265
      %s287 = sphi 0, %s289
      %s290 = sphi 0, %s287
      %s291 = sphi 0, %s290
      %s307 = sphi 0, %s291
      %s313 = sphi 0, %s315
      %s316 = sphi 0, %s313
      %s317 = sphi 0, %s316
      %s333 = sphi 0, %s317
      %s339 = sphi 0, %s341
      %s342 = sphi 0, %s339
      %s343 = sphi 0, %s342
      %s359 = sphi 0, %s343
      %s365 = sphi 0, %s367
      %s368 = sphi 0, %s365
      %s369 = sphi 0, %s368
      %s385 = sphi 0, %s369
      %s391 = sphi 0, %s393
      %s394 = sphi 0, %s391
      %s395 = sphi 0, %s394
      %s411 = sphi 0, %s395
      %s417 = sphi 0, %s419
      %s420 = sphi 0, %s417
      %s421 = sphi 0, %s420
      %s437 = sphi 0, %s421
      %s443 = sphi 0, %s445
      %s446 = sphi 0, %s443
      %s447 = sphi 0, %s446
      %s463 = sphi 0, %s447
      %s467 = sphi 0, %s467
      %s469 = sphi 0, %s467
      %s470 = sphi 0, %s469
      %s484 = sphi 0, %s470
      %s488 = sphi 0, %s488
      %s490 = sphi 0, %s488
      %s491 = sphi 0, %s490
      %s505 = sphi 0, %s491
      %s509 = sphi 0, %s509
      %s511 = sphi 0, %s509
      %s512 = sphi 0, %s511
      %s526 = sphi 0, %s512
      %s530 = sphi 0, %s530
      %s532 = sphi 0, %s530
      %s533 = sphi 0, %s532
      %s547 = sphi 0, %s533
      %s553 = sphi 0, %s555
      %s556 = sphi 0, %s553
      %s557 = sphi 0, %s556
      %s573 = sphi 0, %s557
    $region4: #{bert_forward.1} parent=1 // loop_header_branch
      %34 = sbr.rel (%p32) target = $region8
    $region5: #{bert_forward.1} parent=1 // loop_body
      %s36 = ssub.s32 %s31, 1
      %s37 = ssub.s32 %s31, 2
      %s44 = sadd.s32 1, %s39
      %p45 = scmp.ge.s32.totalorder %s44, 2
      %s46 = scalar_select %p45, 0, %s44
      %s47 = sadd.s32 1, %s38
      %s48 = scalar_select %p45, %s47, %s38
      %p49 = scmp.ge.s32.totalorder %s48, 2
      %s50 = scalar_select %p49, 0, %s48
      %s51 = ssub.s32 %s38, %s50
      %p52 = scmp.eq.s32.totalorder %s51, 0
      %s54 = sadd.s32 %s53, 1
      %s55 = scalar_select %p52, %s53, %s54
      %p58 = pneg %p52
      %p59 = scmp.eq.s32.totalorder %s31, 3
      %p60 = por %p58, %p59
      %p61 = scmp.ne.s32.totalorder %s53, %s56
      %p62 = scmp.eq.s32.totalorder %s31, 0
      %p63 = por %p61, %p62
      %p64 = scmp.ne.s32.totalorder %s53, %s56
      %p65 = scmp.eq.s32.totalorder %s36, 3
      %p66 = por %p64, %p65
      %p67 = scmp.ne.s32.totalorder %s56, %s57
      %p68 = scmp.eq.s32.totalorder %s36, 0
      %p69 = por %p67, %p68
      %p70 = scmp.ne.s32.totalorder %s56, %s57
      %p71 = scmp.eq.s32.totalorder %s37, 3
      %p72 = por %p70, %p71
      %p74 = scmp.ne.s32.totalorder %s57, %s73
      %p75 = scmp.eq.s32.totalorder %s37, 0
      %p76 = por %p74, %p75
      %s77 = ssub.s32 %s38, %s50
      %p78 = scmp.eq.s32.totalorder %s77, 0
      %s80 = sadd.s32 %s79, 1
      %s81 = scalar_select %p78, %s79, %s80
      %p84 = pneg %p78
      %p85 = scmp.eq.s32.totalorder %s31, 3
      %p86 = por %p84, %p85
      %p87 = scmp.ne.s32.totalorder %s79, %s82
      %p88 = scmp.eq.s32.totalorder %s31, 0
      %p89 = por %p87, %p88
      %p90 = scmp.ne.s32.totalorder %s79, %s82
      %p91 = scmp.eq.s32.totalorder %s36, 3
      %p92 = por %p90, %p91
      %p93 = scmp.ne.s32.totalorder %s82, %s83
      %p94 = scmp.eq.s32.totalorder %s36, 0
      %p95 = por %p93, %p94
      %p96 = scmp.ne.s32.totalorder %s82, %s83
      %p97 = scmp.eq.s32.totalorder %s37, 3
      %p98 = por %p96, %p97
      %p100 = scmp.ne.s32.totalorder %s83, %s99
      %p101 = scmp.eq.s32.totalorder %s37, 0
      %p102 = por %p100, %p101
      %s103 = ssub.s32 %s39, %s46
      %p104 = scmp.eq.s32.totalorder %s103, 0
      %s106 = sadd.s32 %s105, 1
      %s107 = scalar_select %p104, %s105, %s106
      %p110 = pneg %p104
      %p111 = scmp.eq.s32.totalorder %s31, 3
      %p112 = por %p110, %p111
      %p113 = scmp.ne.s32.totalorder %s105, %s108
      %p114 = scmp.eq.s32.totalorder %s31, 0
      %p115 = por %p113, %p114
      %p116 = scmp.ne.s32.totalorder %s105, %s108
      %p117 = scmp.eq.s32.totalorder %s36, 3
      %p118 = por %p116, %p117
      %p119 = scmp.ne.s32.totalorder %s108, %s109
      %p120 = scmp.eq.s32.totalorder %s36, 0
      %p121 = por %p119, %p120
      %p122 = scmp.ne.s32.totalorder %s108, %s109
      %p123 = scmp.eq.s32.totalorder %s37, 3
      %p124 = por %p122, %p123
      %p126 = scmp.ne.s32.totalorder %s109, %s125
      %p127 = scmp.eq.s32.totalorder %s37, 0
      %p128 = por %p126, %p127
      %s129 = ssub.s32 %s39, %s46
      %p130 = scmp.eq.s32.totalorder %s129, 0
      %s132 = sadd.s32 %s131, 1
      %s133 = scalar_select %p130, %s131, %s132
      %p136 = pneg %p130
      %p137 = scmp.eq.s32.totalorder %s31, 3
      %p138 = por %p136, %p137
      %p139 = scmp.ne.s32.totalorder %s131, %s134
      %p140 = scmp.eq.s32.totalorder %s31, 0
      %p141 = por %p139, %p140
      %p142 = scmp.ne.s32.totalorder %s131, %s134
      %p143 = scmp.eq.s32.totalorder %s36, 3
      %p144 = por %p142, %p143
      %p145 = scmp.ne.s32.totalorder %s134, %s135
      %p146 = scmp.eq.s32.totalorder %s36, 0
      %p147 = por %p145, %p146
      %p148 = scmp.ne.s32.totalorder %s134, %s135
      %p149 = scmp.eq.s32.totalorder %s37, 3
      %p150 = por %p148, %p149
      %p152 = scmp.ne.s32.totalorder %s135, %s151
      %p153 = scmp.eq.s32.totalorder %s37, 0
      %p154 = por %p152, %p153
      %s155 = ssub.s32 %s39, %s46
      %p156 = scmp.eq.s32.totalorder %s155, 0
      %s158 = sadd.s32 %s157, 1
      %s159 = scalar_select %p156, %s157, %s158
      %p162 = pneg %p156
      %p163 = scmp.eq.s32.totalorder %s31, 3
      %p164 = por %p162, %p163
      %p165 = scmp.ne.s32.totalorder %s157, %s160
      %p166 = scmp.eq.s32.totalorder %s31, 0
      %p167 = por %p165, %p166
      %p168 = scmp.ne.s32.totalorder %s157, %s160
      %p169 = scmp.eq.s32.totalorder %s36, 3
      %p170 = por %p168, %p169
      %p171 = scmp.ne.s32.totalorder %s160, %s161
      %p172 = scmp.eq.s32.totalorder %s36, 0
      %p173 = por %p171, %p172
      %p174 = scmp.ne.s32.totalorder %s160, %s161
      %p175 = scmp.eq.s32.totalorder %s37, 3
      %p176 = por %p174, %p175
      %p178 = scmp.ne.s32.totalorder %s161, %s177
      %p179 = scmp.eq.s32.totalorder %s37, 0
      %p180 = por %p178, %p179
      %s181 = ssub.s32 %s39, %s46
      %p182 = scmp.eq.s32.totalorder %s181, 0
      %s184 = sadd.s32 %s183, 1
      %s185 = scalar_select %p182, %s183, %s184
      %p188 = pneg %p182
      %p189 = scmp.eq.s32.totalorder %s31, 3
      %p190 = por %p188, %p189
      %p191 = scmp.ne.s32.totalorder %s183, %s186
      %p192 = scmp.eq.s32.totalorder %s31, 0
      %p193 = por %p191, %p192
      %p194 = scmp.ne.s32.totalorder %s183, %s186
      %p195 = scmp.eq.s32.totalorder %s36, 3
      %p196 = por %p194, %p195
      %p197 = scmp.ne.s32.totalorder %s186, %s187
      %p198 = scmp.eq.s32.totalorder %s36, 0
      %p199 = por %p197, %p198
      %p200 = scmp.ne.s32.totalorder %s186, %s187
      %p201 = scmp.eq.s32.totalorder %s37, 3
      %p202 = por %p200, %p201
      %p204 = scmp.ne.s32.totalorder %s187, %s203
      %p205 = scmp.eq.s32.totalorder %s37, 0
      %p206 = por %p204, %p205
      %s207 = ssub.s32 %s39, %s46
      %p208 = scmp.eq.s32.totalorder %s207, 0
      %s210 = sadd.s32 %s209, 1
      %s211 = scalar_select %p208, %s209, %s210
      %p214 = pneg %p208
      %p215 = scmp.eq.s32.totalorder %s31, 3
      %p216 = por %p214, %p215
      %p217 = scmp.ne.s32.totalorder %s209, %s212
      %p218 = scmp.eq.s32.totalorder %s31, 0
      %p219 = por %p217, %p218
      %p220 = scmp.ne.s32.totalorder %s209, %s212
      %p221 = scmp.eq.s32.totalorder %s36, 3
      %p222 = por %p220, %p221
      %p223 = scmp.ne.s32.totalorder %s212, %s213
      %p224 = scmp.eq.s32.totalorder %s36, 0
      %p225 = por %p223, %p224
      %p226 = scmp.ne.s32.totalorder %s212, %s213
      %p227 = scmp.eq.s32.totalorder %s37, 3
      %p228 = por %p226, %p227
      %p230 = scmp.ne.s32.totalorder %s213, %s229
      %p231 = scmp.eq.s32.totalorder %s37, 0
      %p232 = por %p230, %p231
      %s233 = ssub.s32 %s39, %s46
      %p234 = scmp.eq.s32.totalorder %s233, 0
      %s236 = sadd.s32 %s235, 1
      %s237 = scalar_select %p234, %s235, %s236
      %p240 = pneg %p234
      %p241 = scmp.eq.s32.totalorder %s31, 3
      %p242 = por %p240, %p241
      %p243 = scmp.ne.s32.totalorder %s235, %s238
      %p244 = scmp.eq.s32.totalorder %s31, 0
      %p245 = por %p243, %p244
      %p246 = scmp.ne.s32.totalorder %s235, %s238
      %p247 = scmp.eq.s32.totalorder %s36, 3
      %p248 = por %p246, %p247
      %p249 = scmp.ne.s32.totalorder %s238, %s239
      %p250 = scmp.eq.s32.totalorder %s36, 0
      %p251 = por %p249, %p250
      %p252 = scmp.ne.s32.totalorder %s238, %s239
      %p253 = scmp.eq.s32.totalorder %s37, 3
      %p254 = por %p252, %p253
      %p256 = scmp.ne.s32.totalorder %s239, %s255
      %p257 = scmp.eq.s32.totalorder %s37, 0
      %p258 = por %p256, %p257
      %s259 = ssub.s32 %s39, %s46
      %p260 = scmp.eq.s32.totalorder %s259, 0
      %s262 = sadd.s32 %s261, 1
      %s263 = scalar_select %p260, %s261, %s262
      %p266 = pneg %p260
      %p267 = scmp.eq.s32.totalorder %s31, 3
      %p268 = por %p266, %p267
      %p269 = scmp.ne.s32.totalorder %s261, %s264
      %p270 = scmp.eq.s32.totalorder %s31, 0
      %p271 = por %p269, %p270
      %p272 = scmp.ne.s32.totalorder %s261, %s264
      %p273 = scmp.eq.s32.totalorder %s36, 3
      %p274 = por %p272, %p273
      %p275 = scmp.ne.s32.totalorder %s264, %s265
      %p276 = scmp.eq.s32.totalorder %s36, 0
      %p277 = por %p275, %p276
      %p278 = scmp.ne.s32.totalorder %s264, %s265
      %p279 = scmp.eq.s32.totalorder %s37, 3
      %p280 = por %p278, %p279
      %p282 = scmp.ne.s32.totalorder %s265, %s281
      %p283 = scmp.eq.s32.totalorder %s37, 0
      %p284 = por %p282, %p283
      %s285 = ssub.s32 %s39, %s46
      %p286 = scmp.eq.s32.totalorder %s285, 0
      %s288 = sadd.s32 %s287, 1
      %s289 = scalar_select %p286, %s287, %s288
      %p292 = pneg %p286
      %p293 = scmp.eq.s32.totalorder %s31, 3
      %p294 = por %p292, %p293
      %p295 = scmp.ne.s32.totalorder %s287, %s290
      %p296 = scmp.eq.s32.totalorder %s31, 0
      %p297 = por %p295, %p296
      %p298 = scmp.ne.s32.totalorder %s287, %s290
      %p299 = scmp.eq.s32.totalorder %s36, 3
      %p300 = por %p298, %p299
      %p301 = scmp.ne.s32.totalorder %s290, %s291
      %p302 = scmp.eq.s32.totalorder %s36, 0
      %p303 = por %p301, %p302
      %p304 = scmp.ne.s32.totalorder %s290, %s291
      %p305 = scmp.eq.s32.totalorder %s37, 3
      %p306 = por %p304, %p305
      %p308 = scmp.ne.s32.totalorder %s291, %s307
      %p309 = scmp.eq.s32.totalorder %s37, 0
      %p310 = por %p308, %p309
      %s311 = ssub.s32 %s39, %s46
      %p312 = scmp.eq.s32.totalorder %s311, 0
      %s314 = sadd.s32 %s313, 1
      %s315 = scalar_select %p312, %s313, %s314
      %p318 = pneg %p312
      %p319 = scmp.eq.s32.totalorder %s31, 3
      %p320 = por %p318, %p319
      %p321 = scmp.ne.s32.totalorder %s313, %s316
      %p322 = scmp.eq.s32.totalorder %s31, 0
      %p323 = por %p321, %p322
      %p324 = scmp.ne.s32.totalorder %s313, %s316
      %p325 = scmp.eq.s32.totalorder %s36, 3
      %p326 = por %p324, %p325
      %p327 = scmp.ne.s32.totalorder %s316, %s317
      %p328 = scmp.eq.s32.totalorder %s36, 0
      %p329 = por %p327, %p328
      %p330 = scmp.ne.s32.totalorder %s316, %s317
      %p331 = scmp.eq.s32.totalorder %s37, 3
      %p332 = por %p330, %p331
      %p334 = scmp.ne.s32.totalorder %s317, %s333
      %p335 = scmp.eq.s32.totalorder %s37, 0
      %p336 = por %p334, %p335
      %s337 = ssub.s32 %s39, %s46
      %p338 = scmp.eq.s32.totalorder %s337, 0
      %s340 = sadd.s32 %s339, 1
      %s341 = scalar_select %p338, %s339, %s340
      %p344 = pneg %p338
      %p345 = scmp.eq.s32.totalorder %s31, 3
      %p346 = por %p344, %p345
      %p347 = scmp.ne.s32.totalorder %s339, %s342
      %p348 = scmp.eq.s32.totalorder %s31, 0
      %p349 = por %p347, %p348
      %p350 = scmp.ne.s32.totalorder %s339, %s342
      %p351 = scmp.eq.s32.totalorder %s36, 3
      %p352 = por %p350, %p351
      %p353 = scmp.ne.s32.totalorder %s342, %s343
      %p354 = scmp.eq.s32.totalorder %s36, 0
      %p355 = por %p353, %p354
      %p356 = scmp.ne.s32.totalorder %s342, %s343
      %p357 = scmp.eq.s32.totalorder %s37, 3
      %p358 = por %p356, %p357
      %p360 = scmp.ne.s32.totalorder %s343, %s359
      %p361 = scmp.eq.s32.totalorder %s37, 0
      %p362 = por %p360, %p361
      %s363 = ssub.s32 %s39, %s46
      %p364 = scmp.eq.s32.totalorder %s363, 0
      %s366 = sadd.s32 %s365, 1
      %s367 = scalar_select %p364, %s365, %s366
      %p370 = pneg %p364
      %p371 = scmp.eq.s32.totalorder %s31, 3
      %p372 = por %p370, %p371
      %p373 = scmp.ne.s32.totalorder %s365, %s368
      %p374 = scmp.eq.s32.totalorder %s31, 0
      %p375 = por %p373, %p374
      %p376 = scmp.ne.s32.totalorder %s365, %s368
      %p377 = scmp.eq.s32.totalorder %s36, 3
      %p378 = por %p376, %p377
      %p379 = scmp.ne.s32.totalorder %s368, %s369
      %p380 = scmp.eq.s32.totalorder %s36, 0
      %p381 = por %p379, %p380
      %p382 = scmp.ne.s32.totalorder %s368, %s369
      %p383 = scmp.eq.s32.totalorder %s37, 3
      %p384 = por %p382, %p383
      %p386 = scmp.ne.s32.totalorder %s369, %s385
      %p387 = scmp.eq.s32.totalorder %s37, 0
      %p388 = por %p386, %p387
      %s389 = ssub.s32 %s39, %s46
      %p390 = scmp.eq.s32.totalorder %s389, 0
      %s392 = sadd.s32 %s391, 1
      %s393 = scalar_select %p390, %s391, %s392
      %p396 = pneg %p390
      %p397 = scmp.eq.s32.totalorder %s31, 3
      %p398 = por %p396, %p397
      %p399 = scmp.ne.s32.totalorder %s391, %s394
      %p400 = scmp.eq.s32.totalorder %s31, 0
      %p401 = por %p399, %p400
      %p402 = scmp.ne.s32.totalorder %s391, %s394
      %p403 = scmp.eq.s32.totalorder %s36, 3
      %p404 = por %p402, %p403
      %p405 = scmp.ne.s32.totalorder %s394, %s395
      %p406 = scmp.eq.s32.totalorder %s36, 0
      %p407 = por %p405, %p406
      %p408 = scmp.ne.s32.totalorder %s394, %s395
      %p409 = scmp.eq.s32.totalorder %s37, 3
      %p410 = por %p408, %p409
      %p412 = scmp.ne.s32.totalorder %s395, %s411
      %p413 = scmp.eq.s32.totalorder %s37, 0
      %p414 = por %p412, %p413
      %s415 = ssub.s32 %s39, %s46
      %p416 = scmp.eq.s32.totalorder %s415, 0
      %s418 = sadd.s32 %s417, 1
      %s419 = scalar_select %p416, %s417, %s418
      %p422 = pneg %p416
      %p423 = scmp.eq.s32.totalorder %s31, 3
      %p424 = por %p422, %p423
      %p425 = scmp.ne.s32.totalorder %s417, %s420
      %p426 = scmp.eq.s32.totalorder %s31, 0
      %p427 = por %p425, %p426
      %p428 = scmp.ne.s32.totalorder %s417, %s420
      %p429 = scmp.eq.s32.totalorder %s36, 3
      %p430 = por %p428, %p429
      %p431 = scmp.ne.s32.totalorder %s420, %s421
      %p432 = scmp.eq.s32.totalorder %s36, 0
      %p433 = por %p431, %p432
      %p434 = scmp.ne.s32.totalorder %s420, %s421
      %p435 = scmp.eq.s32.totalorder %s37, 3
      %p436 = por %p434, %p435
      %p438 = scmp.ne.s32.totalorder %s421, %s437
      %p439 = scmp.eq.s32.totalorder %s37, 0
      %p440 = por %p438, %p439
      %s441 = ssub.s32 %s39, %s46
      %p442 = scmp.eq.s32.totalorder %s441, 0
      %s444 = sadd.s32 %s443, 1
      %s445 = scalar_select %p442, %s443, %s444
      %p448 = pneg %p442
      %p449 = scmp.eq.s32.totalorder %s31, 3
      %p450 = por %p448, %p449
      %p451 = scmp.ne.s32.totalorder %s443, %s446
      %p452 = scmp.eq.s32.totalorder %s31, 0
      %p453 = por %p451, %p452
      %p454 = scmp.ne.s32.totalorder %s443, %s446
      %p455 = scmp.eq.s32.totalorder %s36, 3
      %p456 = por %p454, %p455
      %p457 = scmp.ne.s32.totalorder %s446, %s447
      %p458 = scmp.eq.s32.totalorder %s36, 0
      %p459 = por %p457, %p458
      %p460 = scmp.ne.s32.totalorder %s446, %s447
      %p461 = scmp.eq.s32.totalorder %s37, 3
      %p462 = por %p460, %p461
      %p464 = scmp.ne.s32.totalorder %s447, %s463
      %p465 = scmp.eq.s32.totalorder %s37, 0
      %p466 = por %p464, %p465
      %s468 = sadd.s32 %s467, 1
      %p471 = scmp.eq.s32.totalorder %s31, 3
      %p472 = scmp.ne.s32.totalorder %s467, %s469
      %p473 = scmp.eq.s32.totalorder %s31, 0
      %p474 = por %p472, %p473
      %p475 = scmp.ne.s32.totalorder %s467, %s469
      %p476 = scmp.eq.s32.totalorder %s36, 3
      %p477 = por %p475, %p476
      %p478 = scmp.ne.s32.totalorder %s469, %s470
      %p479 = scmp.eq.s32.totalorder %s36, 0
      %p480 = por %p478, %p479
      %p481 = scmp.ne.s32.totalorder %s469, %s470
      %p482 = scmp.eq.s32.totalorder %s37, 3
      %p483 = por %p481, %p482
      %p485 = scmp.ne.s32.totalorder %s470, %s484
      %p486 = scmp.eq.s32.totalorder %s37, 0
      %p487 = por %p485, %p486
      %s489 = sadd.s32 %s488, 1
      %p492 = scmp.eq.s32.totalorder %s31, 3
      %p493 = scmp.ne.s32.totalorder %s488, %s490
      %p494 = scmp.eq.s32.totalorder %s31, 0
      %p495 = por %p493, %p494
      %p496 = scmp.ne.s32.totalorder %s488, %s490
      %p497 = scmp.eq.s32.totalorder %s36, 3
      %p498 = por %p496, %p497
      %p499 = scmp.ne.s32.totalorder %s490, %s491
      %p500 = scmp.eq.s32.totalorder %s36, 0
      %p501 = por %p499, %p500
      %p502 = scmp.ne.s32.totalorder %s490, %s491
      %p503 = scmp.eq.s32.totalorder %s37, 3
      %p504 = por %p502, %p503
      %p506 = scmp.ne.s32.totalorder %s491, %s505
      %p507 = scmp.eq.s32.totalorder %s37, 0
      %p508 = por %p506, %p507
      %s510 = sadd.s32 %s509, 1
      %p513 = scmp.eq.s32.totalorder %s31, 3
      %p514 = scmp.ne.s32.totalorder %s509, %s511
      %p515 = scmp.eq.s32.totalorder %s31, 0
      %p516 = por %p514, %p515
      %p517 = scmp.ne.s32.totalorder %s509, %s511
      %p518 = scmp.eq.s32.totalorder %s36, 3
      %p519 = por %p517, %p518
      %p520 = scmp.ne.s32.totalorder %s511, %s512
      %p521 = scmp.eq.s32.totalorder %s36, 0
      %p522 = por %p520, %p521
      %p523 = scmp.ne.s32.totalorder %s511, %s512
      %p524 = scmp.eq.s32.totalorder %s37, 3
      %p525 = por %p523, %p524
      %p527 = scmp.ne.s32.totalorder %s512, %s526
      %p528 = scmp.eq.s32.totalorder %s37, 0
      %p529 = por %p527, %p528
      %s531 = sadd.s32 %s530, 1
      %p534 = scmp.eq.s32.totalorder %s31, 3
      %p535 = scmp.ne.s32.totalorder %s530, %s532
      %p536 = scmp.eq.s32.totalorder %s31, 0
      %p537 = por %p535, %p536
      %p538 = scmp.ne.s32.totalorder %s530, %s532
      %p539 = scmp.eq.s32.totalorder %s36, 3
      %p540 = por %p538, %p539
      %p541 = scmp.ne.s32.totalorder %s532, %s533
      %p542 = scmp.eq.s32.totalorder %s36, 0
      %p543 = por %p541, %p542
      %p544 = scmp.ne.s32.totalorder %s532, %s533
      %p545 = scmp.eq.s32.totalorder %s37, 3
      %p546 = por %p544, %p545
      %p548 = scmp.ne.s32.totalorder %s533, %s547
      %p549 = scmp.eq.s32.totalorder %s37, 0
      %p550 = por %p548, %p549
      %s551 = ssub.s32 %s38, %s50
      %p552 = scmp.eq.s32.totalorder %s551, 0
      %s554 = sadd.s32 %s553, 1
      %s555 = scalar_select %p552, %s553, %s554
      %p558 = pneg %p552
      %p559 = scmp.eq.s32.totalorder %s31, 3
      %p560 = por %p558, %p559
      %p561 = scmp.ne.s32.totalorder %s553, %s556
      %p562 = scmp.eq.s32.totalorder %s31, 0
      %p563 = por %p561, %p562
      %p564 = scmp.ne.s32.totalorder %s553, %s556
      %p565 = scmp.eq.s32.totalorder %s36, 3
      %p566 = por %p564, %p565
      %p567 = scmp.ne.s32.totalorder %s556, %s557
      %p568 = scmp.eq.s32.totalorder %s36, 0
      %p569 = por %p567, %p568
      %p570 = scmp.ne.s32.totalorder %s556, %s557
      %p571 = scmp.eq.s32.totalorder %s37, 3
      %p572 = por %p570, %p571
      %p574 = scmp.ne.s32.totalorder %s557, %s573
      %p575 = scmp.eq.s32.totalorder %s37, 0
      %p576 = por %p574, %p575
      %p577 = scmp.le.s32.totalorder 1, %s31
      %p578 = scmp.lt.s32.totalorder %s31, 5
      %p579 = pnand %p577, %p578
      %p580 = pneg %p579
      // Predicated region
      $region9: #{bert_forward.1} parent=5 // pred_check
        _
      $region10: #{bert_forward.1} parent=5 // pred_check_branch
        %582 = sbr.rel (%p579) target = $region12
      $region11: #{bert_forward.1} parent=5 // pred_region
        %s583 = ssub.s32 %s31, 1
        // Predicated region
        $region13: #{bert_forward.1} parent=11 // pred_check
          %p584 = pneg %p480
        $region14: #{bert_forward.1} parent=11 // pred_check_branch
          %586 = sbr.rel (%p584) target = $region16
        $region15: #{bert_forward.1} parent=11 // pred_region
          _
        $region16: #{bert_forward.1} parent=11 // pred_fallthru
          _
        // Predicated region
        $region17: #{bert_forward.1} parent=11 // pred_check
          %p587 = pneg %p501
        $region18: #{bert_forward.1} parent=11 // pred_check_branch
          %589 = sbr.rel (%p587) target = $region20
        $region19: #{bert_forward.1} parent=11 // pred_region
          _
        $region20: #{bert_forward.1} parent=11 // pred_fallthru
          _
        // Predicated region
        $region21: #{bert_forward.1} parent=11 // pred_check
          %p590 = pneg %p522
        $region22: #{bert_forward.1} parent=11 // pred_check_branch
          %592 = sbr.rel (%p590) target = $region24
        $region23: #{bert_forward.1} parent=11 // pred_region
          _
        $region24: #{bert_forward.1} parent=11 // pred_fallthru
          _
        // Predicated region
        $region25: #{bert_forward.1} parent=11 // pred_check
          %p593 = pneg %p543
        $region26: #{bert_forward.1} parent=11 // pred_check_branch
          %595 = sbr.rel (%p593) target = $region28
        $region27: #{bert_forward.1} parent=11 // pred_region
          _
        $region28: #{bert_forward.1} parent=11 // pred_fallthru
          _
      $region12: #{bert_forward.1} parent=5 // pred_fallthru
        _
      %p596 = scmp.lt.s32.totalorder %s31, 4
      // Predicated region
      $region29: #{bert_forward.1} parent=5 // pred_check
        %p597 = pneg %p596
      $region30: #{bert_forward.1} parent=5 // pred_check_branch
        %599 = sbr.rel (%p597) target = $region32
      $region31: #{bert_forward.1} parent=5 // pred_region
        // Predicated region
        $region33: #{bert_forward.1} parent=31 // pred_check
          %p600 = pneg %p63
        $region34: #{bert_forward.1} parent=31 // pred_check_branch
          %602 = sbr.rel (%p600) target = $region36
        $region35: #{bert_forward.1} parent=31 // pred_region
          %p603 = scmp.lt.s32.totalorder %s38, 1
          %s604 = scalar_select %p603, %s38, 1
          %s605 = smul.addr %s604, 8
          %s606 = scalar_lea.vmem %s0, %s605
        $region36: #{bert_forward.1} parent=31 // pred_fallthru
          _
        // Predicated region
        $region37: #{bert_forward.1} parent=31 // pred_check
          %p607 = pneg %p89
        $region38: #{bert_forward.1} parent=31 // pred_check_branch
          %609 = sbr.rel (%p607) target = $region40
        $region39: #{bert_forward.1} parent=31 // pred_region
          %p610 = scmp.lt.s32.totalorder %s38, 1
          %s611 = scalar_select %p610, %s38, 1
          %s612 = smul.addr %s611, 8
          %s613 = scalar_lea.vmem %s1, %s612
        $region40: #{bert_forward.1} parent=31 // pred_fallthru
          _
        // Predicated region
        $region41: #{bert_forward.1} parent=31 // pred_check
          %p614 = pneg %p115
        $region42: #{bert_forward.1} parent=31 // pred_check_branch
          %616 = sbr.rel (%p614) target = $region44
        $region43: #{bert_forward.1} parent=31 // pred_region
          %p617 = scmp.lt.s32.totalorder %s39, 1
          %s618 = scalar_select %p617, %s39, 1
          %s619 = smul.addr %s618, 4
          %s620 = smul.addr %s619, 4
          %s621 = scalar_lea.vmem %s2, %s620
        $region44: #{bert_forward.1} parent=31 // pred_fallthru
          _
        // Predicated region
        $region45: #{bert_forward.1} parent=31 // pred_check
          %p622 = pneg %p141
        $region46: #{bert_forward.1} parent=31 // pred_check_branch
          %624 = sbr.rel (%p622) target = $region48
        $region47: #{bert_forward.1} parent=31 // pred_region
          %p625 = scmp.lt.s32.totalorder %s39, 1
          %s626 = scalar_select %p625, %s39, 1
          %s627 = scalar_lea.vmem %s3, %s626
        $region48: #{bert_forward.1} parent=31 // pred_fallthru
          _
        // Predicated region
        $region49: #{bert_forward.1} parent=31 // pred_check
          %p628 = pneg %p167
        $region50: #{bert_forward.1} parent=31 // pred_check_branch
          %630 = sbr.rel (%p628) target = $region52
        $region51: #{bert_forward.1} parent=31 // pred_region
          %p631 = scmp.lt.s32.totalorder %s39, 1
          %s632 = scalar_select %p631, %s39, 1
          %s633 = smul.addr %s632, 4
          %s634 = smul.addr %s633, 4
          %s635 = scalar_lea.vmem %s4, %s634
        $region52: #{bert_forward.1} parent=31 // pred_fallthru
          _
        // Predicated region
        $region53: #{bert_forward.1} parent=31 // pred_check
          %p636 = pneg %p193
        $region54: #{bert_forward.1} parent=31 // pred_check_branch
          %638 = sbr.rel (%p636) target = $region56
        $region55: #{bert_forward.1} parent=31 // pred_region
          %p639 = scmp.lt.s32.totalorder %s39, 1
          %s640 = scalar_select %p639, %s39, 1
          %s641 = scalar_lea.vmem %s5, %s640
        $region56: #{bert_forward.1} parent=31 // pred_fallthru
          _
        // Predicated region
        $region57: #{bert_forward.1} parent=31 // pred_check
          %p642 = pneg %p219
        $region58: #{bert_forward.1} parent=31 // pred_check_branch
          %644 = sbr.rel (%p642) target = $region60
        $region59: #{bert_forward.1} parent=31 // pred_region
          %p645 = scmp.lt.s32.totalorder %s39, 1
          %s646 = scalar_select %p645, %s39, 1
          %s647 = scalar_lea.vmem %s6, %s646
        $region60: #{bert_forward.1} parent=31 // pred_fallthru
          _
        // Predicated region
        $region61: #{bert_forward.1} parent=31 // pred_check
          %p648 = pneg %p245
        $region62: #{bert_forward.1} parent=31 // pred_check_branch
          %650 = sbr.rel (%p648) target = $region64
        $region63: #{bert_forward.1} parent=31 // pred_region
          %p651 = scmp.lt.s32.totalorder %s39, 1
          %s652 = scalar_select %p651, %s39, 1
          %s653 = scalar_lea.vmem %s7, %s652
        $region64: #{bert_forward.1} parent=31 // pred_fallthru
          _
        // Predicated region
        $region65: #{bert_forward.1} parent=31 // pred_check
          %p654 = pneg %p271
        $region66: #{bert_forward.1} parent=31 // pred_check_branch
          %656 = sbr.rel (%p654) target = $region68
        $region67: #{bert_forward.1} parent=31 // pred_region
          %p657 = scmp.lt.s32.totalorder %s39, 1
          %s658 = scalar_select %p657, %s39, 1
          %s659 = scalar_lea.vmem %s8, %s658
        $region68: #{bert_forward.1} parent=31 // pred_fallthru
          _
        // Predicated region
        $region69: #{bert_forward.1} parent=31 // pred_check
          %p660 = pneg %p297
        $region70: #{bert_forward.1} parent=31 // pred_check_branch
          %662 = sbr.rel (%p660) target = $region72
        $region71: #{bert_forward.1} parent=31 // pred_region
          %p663 = scmp.lt.s32.totalorder %s39, 1
          %s664 = scalar_select %p663, %s39, 1
          %s665 = scalar_lea.vmem %s9, %s664
        $region72: #{bert_forward.1} parent=31 // pred_fallthru
          _
        // Predicated region
        $region73: #{bert_forward.1} parent=31 // pred_check
          %p666 = pneg %p323
        $region74: #{bert_forward.1} parent=31 // pred_check_branch
          %668 = sbr.rel (%p666) target = $region76
        $region75: #{bert_forward.1} parent=31 // pred_region
          %p669 = scmp.lt.s32.totalorder %s39, 1
          %s670 = scalar_select %p669, %s39, 1
          %s671 = smul.addr %s670, 4
          %s672 = smul.addr %s671, 4
          %s673 = scalar_lea.vmem %s10, %s672
        $region76: #{bert_forward.1} parent=31 // pred_fallthru
          _
        // Predicated region
        $region77: #{bert_forward.1} parent=31 // pred_check
          %p674 = pneg %p349
        $region78: #{bert_forward.1} parent=31 // pred_check_branch
          %676 = sbr.rel (%p674) target = $region80
        $region79: #{bert_forward.1} parent=31 // pred_region
          %p677 = scmp.lt.s32.totalorder %s39, 1
          %s678 = scalar_select %p677, %s39, 1
          %s679 = scalar_lea.vmem %s11, %s678
        $region80: #{bert_forward.1} parent=31 // pred_fallthru
          _
        // Predicated region
        $region81: #{bert_forward.1} parent=31 // pred_check
          %p680 = pneg %p375
        $region82: #{bert_forward.1} parent=31 // pred_check_branch
          %682 = sbr.rel (%p680) target = $region84
        $region83: #{bert_forward.1} parent=31 // pred_region
          %p683 = scmp.lt.s32.totalorder %s39, 1
          %s684 = scalar_select %p683, %s39, 1
          %s685 = smul.addr %s684, 8
          %s686 = smul.addr %s685, 4
          %s687 = scalar_lea.vmem %s12, %s686
        $region84: #{bert_forward.1} parent=31 // pred_fallthru
          _
        // Predicated region
        $region85: #{bert_forward.1} parent=31 // pred_check
          %p688 = pneg %p401
        $region86: #{bert_forward.1} parent=31 // pred_check_branch
          %690 = sbr.rel (%p688) target = $region88
        $region87: #{bert_forward.1} parent=31 // pred_region
          %p691 = scmp.lt.s32.totalorder %s39, 1
          %s692 = scalar_select %p691, %s39, 1
          %s693 = scalar_lea.vmem %s13, %s692
        $region88: #{bert_forward.1} parent=31 // pred_fallthru
          _
        // Predicated region
        $region89: #{bert_forward.1} parent=31 // pred_check
          %p694 = pneg %p427
        $region90: #{bert_forward.1} parent=31 // pred_check_branch
          %696 = sbr.rel (%p694) target = $region92
        $region91: #{bert_forward.1} parent=31 // pred_region
          %p697 = scmp.lt.s32.totalorder %s39, 1
          %s698 = scalar_select %p697, %s39, 1
          %s699 = scalar_lea.vmem %s14, %s698
        $region92: #{bert_forward.1} parent=31 // pred_fallthru
          _
        // Predicated region
        $region93: #{bert_forward.1} parent=31 // pred_check
          %p700 = pneg %p453
        $region94: #{bert_forward.1} parent=31 // pred_check_branch
          %702 = sbr.rel (%p700) target = $region96
        $region95: #{bert_forward.1} parent=31 // pred_region
          %p703 = scmp.lt.s32.totalorder %s39, 1
          %s704 = scalar_select %p703, %s39, 1
          %s705 = scalar_lea.vmem %s15, %s704
        $region96: #{bert_forward.1} parent=31 // pred_fallthru
          _
      $region32: #{bert_forward.1} parent=5 // pred_fallthru
        _
      %p706 = scmp.le.s32.totalorder 1, %s31
      %p707 = scmp.lt.s32.totalorder %s31, 5
      %p708 = pnand %p706, %p707
      %p709 = pneg %p708
      // Predicated region
      $region97: #{bert_forward.1} parent=5 // pred_check
        _
      $region98: #{bert_forward.1} parent=5 // pred_check_branch
        %711 = sbr.rel (%p708) target = $region100
      $region99: #{bert_forward.1} parent=5 // pred_region
        %s712 = ssub.s32 %s31, 1
        %p713 = scmp.lt.s32.totalorder %s40, 1
        %s714 = scalar_select %p713, %s40, 1
        %s715 = smul.addr %s714, 8
        %s716 = scalar_lea.vmem %s0, %s715
        %p717 = pneg %p69
        %p718 = pneg %p66
        %p719 = scmp.lt.s32.totalorder %s40, 1
        %s720 = scalar_select %p719, %s40, 1
        %s721 = smul.addr %s720, 8
        %s722 = scalar_lea.vmem %s1, %s721
        %p723 = pneg %p95
        %p724 = pneg %p92
        %p725 = scmp.lt.s32.totalorder %s41, 1
        %s726 = scalar_select %p725, %s41, 1
        %s727 = smul.addr %s726, 4
        %s728 = smul.addr %s727, 4
        %s729 = scalar_lea.vmem %s2, %s728
        %p730 = pneg %p121
        %p731 = pneg %p118
        %p732 = scmp.lt.s32.totalorder %s41, 1
        %s733 = scalar_select %p732, %s41, 1
        %s734 = scalar_lea.vmem %s3, %s733
        %p735 = pneg %p147
        %p736 = pneg %p144
        %p737 = scmp.lt.s32.totalorder %s41, 1
        %s738 = scalar_select %p737, %s41, 1
        %s739 = smul.addr %s738, 4
        %s740 = smul.addr %s739, 4
        %s741 = scalar_lea.vmem %s4, %s740
        %p742 = pneg %p173
        %p743 = pneg %p170
        %p744 = scmp.lt.s32.totalorder %s41, 1
        %s745 = scalar_select %p744, %s41, 1
        %s746 = scalar_lea.vmem %s5, %s745
        %p747 = pneg %p199
        %p748 = pneg %p196
        %p749 = scmp.lt.s32.totalorder %s41, 1
        %s750 = scalar_select %p749, %s41, 1
        %s751 = scalar_lea.vmem %s6, %s750
        %p752 = pneg %p225
        %p753 = pneg %p222
        %p754 = scmp.lt.s32.totalorder %s41, 1
        %s755 = scalar_select %p754, %s41, 1
        %s756 = scalar_lea.vmem %s7, %s755
        %p757 = pneg %p251
        %p758 = pneg %p248
        %p759 = scmp.lt.s32.totalorder %s41, 1
        %s760 = scalar_select %p759, %s41, 1
        %s761 = scalar_lea.vmem %s8, %s760
        %p762 = pneg %p277
        %p763 = pneg %p274
        %p764 = scmp.lt.s32.totalorder %s41, 1
        %s765 = scalar_select %p764, %s41, 1
        %s766 = scalar_lea.vmem %s9, %s765
        %p767 = pneg %p303
        %p768 = pneg %p300
        %p769 = scmp.lt.s32.totalorder %s41, 1
        %s770 = scalar_select %p769, %s41, 1
        %s771 = smul.addr %s770, 4
        %s772 = smul.addr %s771, 4
        %s773 = scalar_lea.vmem %s10, %s772
        %p774 = pneg %p329
        %p775 = pneg %p326
        %p776 = scmp.lt.s32.totalorder %s41, 1
        %s777 = scalar_select %p776, %s41, 1
        %s778 = scalar_lea.vmem %s11, %s777
        %p779 = pneg %p355
        %p780 = pneg %p352
        %p781 = scmp.lt.s32.totalorder %s41, 1
        %s782 = scalar_select %p781, %s41, 1
        %s783 = smul.addr %s782, 8
        %s784 = smul.addr %s783, 4
        %s785 = scalar_lea.vmem %s12, %s784
        %p786 = pneg %p381
        %p787 = pneg %p378
        %p788 = scmp.lt.s32.totalorder %s41, 1
        %s789 = scalar_select %p788, %s41, 1
        %s790 = scalar_lea.vmem %s13, %s789
        %p791 = pneg %p407
        %p792 = pneg %p404
        %p793 = scmp.lt.s32.totalorder %s41, 1
        %s794 = scalar_select %p793, %s41, 1
        %s795 = scalar_lea.vmem %s14, %s794
        %p796 = pneg %p433
        %p797 = pneg %p430
        %p798 = scmp.lt.s32.totalorder %s41, 1
        %s799 = scalar_select %p798, %s41, 1
        %s800 = scalar_lea.vmem %s15, %s799
        %p801 = pneg %p459
        %p802 = pneg %p456
        %p803 = pneg %p480
        %p804 = pneg %p477
        %p805 = pneg %p501
        %p806 = pneg %p498
        %p807 = pneg %p522
        %p808 = pneg %p519
        %p809 = pneg %p543
        %p810 = pneg %p540
        %p811 = pneg %p569
        %p812 = pneg %p566
        %s813 = sand.u32 %s556, 1
        %s814 = scalar_lea.sflag [#allocation7], %s813
        %s815 = sand.u32 %s556, 1
        %s816 = smul.addr %s815, 8
        %s817 = scalar_lea.vmem [#allocation6], %s816
        %p818 = scmp.lt.s32.totalorder %s40, 1
        %s819 = scalar_select %p818, %s40, 1
        %s820 = smul.addr %s819, 8
        %s821 = scalar_lea.vmem %s0, %s820
        %p822 = scmp.lt.s32.totalorder %s40, 1
        %s823 = scalar_select %p822, %s40, 1
        %s824 = smul.addr %s823, 8
        %s825 = scalar_lea.vmem %s1, %s824
        %p826 = scmp.lt.s32.totalorder %s41, 1
        %s827 = scalar_select %p826, %s41, 1
        %s828 = smul.addr %s827, 4
        %s829 = smul.addr %s828, 4
        %s830 = scalar_lea.vmem %s2, %s829
        %p831 = scmp.lt.s32.totalorder %s41, 1
        %s832 = scalar_select %p831, %s41, 1
        %s833 = scalar_lea.vmem %s3, %s832
        %p834 = scmp.lt.s32.totalorder %s41, 1
        %s835 = scalar_select %p834, %s41, 1
        %s836 = smul.addr %s835, 4
        %s837 = smul.addr %s836, 4
        %s838 = scalar_lea.vmem %s4, %s837
        %p839 = scmp.lt.s32.totalorder %s41, 1
        %s840 = scalar_select %p839, %s41, 1
        %s841 = scalar_lea.vmem %s5, %s840
        %p842 = scmp.lt.s32.totalorder %s41, 1
        %s843 = scalar_select %p842, %s41, 1
        %s844 = scalar_lea.vmem %s6, %s843
        %p845 = scmp.lt.s32.totalorder %s41, 1
        %s846 = scalar_select %p845, %s41, 1
        %s847 = scalar_lea.vmem %s7, %s846
        %p848 = scmp.lt.s32.totalorder %s41, 1
        %s849 = scalar_select %p848, %s41, 1
        %s850 = scalar_lea.vmem %s8, %s849
        %p851 = scmp.lt.s32.totalorder %s41, 1
        %s852 = scalar_select %p851, %s41, 1
        %s853 = scalar_lea.vmem %s9, %s852
        %p854 = scmp.lt.s32.totalorder %s41, 1
        %s855 = scalar_select %p854, %s41, 1
        %s856 = smul.addr %s855, 4
        %s857 = smul.addr %s856, 4
        %s858 = scalar_lea.vmem %s10, %s857
        %p859 = scmp.lt.s32.totalorder %s41, 1
        %s860 = scalar_select %p859, %s41, 1
        %s861 = scalar_lea.vmem %s11, %s860
        %p862 = scmp.lt.s32.totalorder %s41, 1
        %s863 = scalar_select %p862, %s41, 1
        %s864 = smul.addr %s863, 8
        %s865 = smul.addr %s864, 4
        %s866 = scalar_lea.vmem %s12, %s865
        %p867 = scmp.lt.s32.totalorder %s41, 1
        %s868 = scalar_select %p867, %s41, 1
        %s869 = scalar_lea.vmem %s13, %s868
        %p870 = scmp.lt.s32.totalorder %s41, 1
        %s871 = scalar_select %p870, %s41, 1
        %s872 = scalar_lea.vmem %s14, %s871
        %p873 = scmp.lt.s32.totalorder %s41, 1
        %s874 = scalar_select %p873, %s41, 1
        %s875 = scalar_lea.vmem %s15, %s874
        %p877 = scmp.eq.s32.totalorder %s41, 0
        // Predicated region
        $region101: #{bert_forward.1} parent=99 // pred_check
          %p878 = pneg %p877
        $region102: #{bert_forward.1} parent=99 // pred_check_branch
          %880 = sbr.rel (%p878) target = $region104
        $region103: #{bert_forward.1} parent=99 // pred_region
          %v881 = vld [vmem:[%s821] sm:$0xff]
          %vm882 = vcmask 261120
          %883 = vst.msk [vmem:[#allocation2] sm:$0xff] %vm882, %v881
        $region104: #{bert_forward.1} parent=99 // pred_fallthru
          _
        %v884 = vld [vmem:[#allocation2] sm:$0xff]
        %v885 = vld [vmem:[%s844] sm:$0x1]
        %v886 = vld [vmem:[%s847] sm:$0x1]
        %vm887 = vcmask 261120
        %v888 = vsel %vm887, %v884, 0.0
        %889 = vadd.xlane.f32.xlu0 %v888
        %v890 = vpop.xlane.xlu0 %889
        %v891 = vrcp.pop 32.0
        %v892 = vmul.f32 32.0, %v891
        %v893 = vsub.f32 1.0, %v892
        %v894 = vmul.f32 %v891, %v893
        %v895 = vadd.f32 %v891, %v894
        %vm896 = vweird.f32 %v891
        %v897 = vsel %vm896, %v891, %v895
        %v898 = vmul.f32 %v890, %v897
        %v899 = vsub.f32 %v884, %v898
        %v900 = vmul.f32 %v899, %v899
        %v901 = vsel %vm887, %v900, 0.0
        %902 = vadd.xlane.f32.xlu0 %v901
        %v903 = vpop.xlane.xlu0 %902
        %v904 = vmul.f32 %v903, %v897
        %v905 = vadd.f32 %v904, 1e-06
        %v906 = vrsqrt.pop %v905
        %v907 = vmul.f32 %v906, %v905
        %v908 = vmul.f32 %v907, %v906
        %v909 = vmul.f32 0.5, %v908
        %v910 = vsub.f32 1.5, %v909
        %v911 = vmul.f32 %v906, %v910
        %vm912 = vweird.f32 %v905
        %vm913 = vweird.f32 %v906
        %vm914 = vmor %vm912, %vm913
        %v915 = vsel %vm914, %v906, %v911
        %v916 = vmul.f32 %v899, %v915
        %v918 = vperm.slane %v885, 0
        %v920 = vmul.f32 %v916, %v918
        %v922 = vperm.slane %v886, 0
        %v924 = vadd.f32 %v920, %v922
        %v925 = vld [vmem:[%s830] sm:$0xf]
        %v926 = vld [vmem:[%s830 + $0x4] sm:$0xf]
        %v927 = vld [vmem:[%s830 + $0x8] sm:$0xf]
        %v928 = vld [vmem:[%s830 + $0xc] sm:$0xf]
        %v929 = vpack.c.bf16 %v924, %v924
        %v930 = vld [vmem:[%s833] sm:$0x1]
        %v932 = vperm.slane %v930, 0
        %v938 = vunpack.c.l.b16 %v925
        %v939 = vunpack.c.l.b16 %v926
        %v940 = vunpack.c.l.b16 %v927
        %v941 = vunpack.c.l.b16 %v928
        %v942 = vpack.c.b16 %v939, %v938
        %v943 = vpack.c.b16 %v941, %v940
        %v947 = vsel %vm887, %v929, 0
        %949 = vmatpush.bf16.msra.mxu0 0
        %950 = vmatpush.bf16.msra.mxu0 0
        %951 = vmatpush.bf16.msra.mxu0 0
        %952 = vmatpush.bf16.msra.mxu0 0
        %953 = vmatpush.bf16.msra.mxu0 0
        %954 = vmatpush.bf16.msra.mxu0 0
        %955 = vmatpush.bf16.msra.mxu0 %v943
        %956 = vmatpush.bf16.msra.mxu0 %v942
        %957 = vmatmul.bf16.gmra.mxu0 %v947
        %v958 = vpop.f32.mrf.mxu0
        %v959 = vadd.f32 %v932, %v958
        %v960 = vpop.f32.mrf.mxu0
        %961 = vdwg.mxu0
        %v962 = vld [vmem:[%s825] sm:$0xff]
        %964 = vrot.lane.b32.xlu0 %v959, 96
        %v965 = vpop.permute.xlu0 %964
        %967 = vxpose.xlu0.b32.start [1/16] %v965, 128
        %968 = vxpose.xlu0.b32.cont [2/16] 0.0, 128
        %969 = vxpose.xlu0.b32.cont [3/16] 0.0, 128
        %970 = vxpose.xlu0.b32.cont [4/16] 0.0, 128
        %971 = vxpose.xlu0.b32.cont [5/16] 0.0, 128
        %972 = vxpose.xlu0.b32.cont [6/16] 0.0, 128
        %973 = vxpose.xlu0.b32.cont [7/16] 0.0, 128
        %974 = vxpose.xlu0.b32.cont [8/16] 0.0, 128
        %975 = vxpose.xlu0.b32.cont [9/16] 0.0, 128
        %976 = vxpose.xlu0.b32.cont [10/16] 0.0, 128
        %977 = vxpose.xlu0.b32.cont [11/16] 0.0, 128
        %978 = vxpose.xlu0.b32.cont [12/16] 0.0, 128
        %979 = vxpose.xlu0.b32.cont [13/16] 0.0, 128
        %980 = vxpose.xlu0.b32.cont [14/16] 0.0, 128
        %981 = vxpose.xlu0.b32.cont [15/16] 0.0, 128
        %982 = vxpose.xlu0.b32.end [16/16] 0.0, 128
        %v983 = vpop.trf.xlu0
        %v984 = vpop.trf.xlu0
        %v985 = vpop.trf.xlu0
        %v986 = vpop.trf.xlu0
        %v987 = vpop.trf.xlu0
        %v988 = vpop.trf.xlu0
        %v989 = vpop.trf.xlu0
        %v990 = vpop.trf.xlu0
        %v991 = vpop.trf.xlu0
        %v992 = vpop.trf.xlu0
        %v993 = vpop.trf.xlu0
        %v994 = vpop.trf.xlu0
        %v995 = vpop.trf.xlu0
        %v996 = vpop.trf.xlu0
        %v997 = vpop.trf.xlu0
        %v998 = vpop.trf.xlu0
        %v999 = vpack.c.bf16 %v959, %v959
        %v1000 = vpack.c.bf16 %v983, %v983
        %vm1001 = vcmask 64512
        %v1003 = vsel %vm1001, %v999, 0
        %vm1005 = vcmask 1043456
        %v1007 = vsel %vm1005, %v1000, 0
        %1009 = vmatpush.bf16.msra.mxu0 0
        %1010 = vmatpush.bf16.msra.mxu0 0
        %1011 = vmatpush.bf16.msra.mxu0 0
        %1012 = vmatpush.bf16.msra.mxu0 0
        %1013 = vmatpush.bf16.msra.mxu0 0
        %1014 = vmatpush.bf16.msra.mxu0 0
        %1015 = vmatpush.bf16.msra.mxu0 0
        %1016 = vmatpush.bf16.msra.mxu0 %v1007
        %1017 = vmatmul.bf16.gmra.mxu0 %v1003
        %v1018 = vpop.f32.mrf.mxu0
        %v1019 = vadd.f32 %v962, %v1018
        %v1020 = vpop.f32.mrf.mxu0
        %1021 = vdwg.mxu0
        %v1022 = vsel %vm1001, %v1019, -inf
        %1023 = vmax.xlane.f32.xlu0 %v1022
        %v1024 = vpop.xlane.xlu0 %1023
        %v1025 = vsub.f32 %v1019, %v1024
        %v1026 = vmul.f32 %v1025, 1.442695
        %v1027 = vpow.pop %v1026
        %v1028 = vsel %vm1001, %v1027, 0.0
        %1029 = vadd.xlane.f32.xlu0 %v1028
        %v1030 = vpop.xlane.xlu0 %1029
        %v1031 = vrcp.pop %v1030
        %v1032 = vmul.f32 %v1027, %v1031
        %v1033 = vpack.c.bf16 %v1032, %v1032
        %1035 = vrot.lane.b32.xlu0 %v999, 64
        %v1036 = vpop.permute.xlu0 %1035
        %v1038 = vsel %vm1001, %v1033, 0
        %v1041 = vsel %vm1005, %v1036, 0
        %1043 = vmatpush.bf16.msra.mxu0 0
        %1044 = vmatpush.bf16.msra.mxu0 0
        %1045 = vmatpush.bf16.msra.mxu0 0
        %1046 = vmatpush.bf16.msra.mxu0 0
        %1047 = vmatpush.bf16.msra.mxu0 0
        %1048 = vmatpush.bf16.msra.mxu0 0
        %1049 = vmatpush.bf16.msra.mxu0 0
        %1050 = vmatpush.bf16.msra.mxu0 %v1041
        %1051 = vmatmul.bf16.gmra.mxu0 %v1038
        %v1052 = vpop.f32.mrf.mxu0
        %v1053 = vadd.f32 0.0, %v1052
        %v1054 = vpop.f32.mrf.mxu0
        %1055 = vdwg.mxu0
        %1056 = vst.msk [vmem:[#allocation3] sm:$0xff] %vm1001, %v1053
        %1057 = vrot.lane.b32.xlu0 %v959, 88
        %v1058 = vpop.permute.xlu0 %1057
        %1060 = vxpose.xlu0.b32.start [1/16] %v1058, 128
        %1061 = vxpose.xlu0.b32.cont [2/16] 0.0, 128
        %1062 = vxpose.xlu0.b32.cont [3/16] 0.0, 128
        %1063 = vxpose.xlu0.b32.cont [4/16] 0.0, 128
        %1064 = vxpose.xlu0.b32.cont [5/16] 0.0, 128
        %1065 = vxpose.xlu0.b32.cont [6/16] 0.0, 128
        %1066 = vxpose.xlu0.b32.cont [7/16] 0.0, 128
        %1067 = vxpose.xlu0.b32.cont [8/16] 0.0, 128
        %1068 = vxpose.xlu0.b32.cont [9/16] 0.0, 128
        %1069 = vxpose.xlu0.b32.cont [10/16] 0.0, 128
        %1070 = vxpose.xlu0.b32.cont [11/16] 0.0, 128
        %1071 = vxpose.xlu0.b32.cont [12/16] 0.0, 128
        %1072 = vxpose.xlu0.b32.cont [13/16] 0.0, 128
        %1073 = vxpose.xlu0.b32.cont [14/16] 0.0, 128
        %1074 = vxpose.xlu0.b32.cont [15/16] 0.0, 128
        %1075 = vxpose.xlu0.b32.end [16/16] 0.0, 128
        %v1076 = vpop.trf.xlu0
        %v1077 = vpop.trf.xlu0
        %v1078 = vpop.trf.xlu0
        %v1079 = vpop.trf.xlu0
        %v1080 = vpop.trf.xlu0
        %v1081 = vpop.trf.xlu0
        %v1082 = vpop.trf.xlu0
        %v1083 = vpop.trf.xlu0
        %v1084 = vpop.trf.xlu0
        %v1085 = vpop.trf.xlu0
        %v1086 = vpop.trf.xlu0
        %v1087 = vpop.trf.xlu0
        %v1088 = vpop.trf.xlu0
        %v1089 = vpop.trf.xlu0
        %v1090 = vpop.trf.xlu0
        %v1091 = vpop.trf.xlu0
        %v1092 = vpack.c.bf16 %v1076, %v1076
        %1093 = vrot.lane.b32.xlu0 %v999, 120
        %v1094 = vpop.permute.xlu0 %1093
        %v1096 = vsel %vm1001, %v1094, 0
        %v1099 = vsel %vm1005, %v1092, 0
        %1101 = vmatpush.bf16.msra.mxu0 0
        %1102 = vmatpush.bf16.msra.mxu0 0
        %1103 = vmatpush.bf16.msra.mxu0 0
        %1104 = vmatpush.bf16.msra.mxu0 0
        %1105 = vmatpush.bf16.msra.mxu0 0
        %1106 = vmatpush.bf16.msra.mxu0 0
        %1107 = vmatpush.bf16.msra.mxu0 0
        %1108 = vmatpush.bf16.msra.mxu0 %v1099
        %1109 = vmatmul.bf16.gmra.mxu0 %v1096
        %v1110 = vpop.f32.mrf.mxu0
        %v1111 = vadd.f32 %v962, %v1110
        %v1112 = vpop.f32.mrf.mxu0
        %1113 = vdwg.mxu0
        %v1114 = vsel %vm1001, %v1111, -inf
        %1115 = vmax.xlane.f32.xlu0 %v1114
        %v1116 = vpop.xlane.xlu0 %1115
        %v1117 = vsub.f32 %v1111, %v1116
        %v1118 = vmul.f32 %v1117, 1.442695
        %v1119 = vpow.pop %v1118
        %v1120 = vsel %vm1001, %v1119, 0.0
        %1121 = vadd.xlane.f32.xlu0 %v1120
        %v1122 = vpop.xlane.xlu0 %1121
        %v1123 = vrcp.pop %v1122
        %v1124 = vmul.f32 %v1119, %v1123
        %v1125 = vpack.c.bf16 %v1124, %v1124
        %1126 = vrot.lane.b32.xlu0 %v999, 56
        %v1127 = vpop.permute.xlu0 %1126
        %v1129 = vsel %vm1001, %v1125, 0
        %v1132 = vsel %vm1005, %v1127, 0
        %1134 = vmatpush.bf16.msra.mxu0 0
        %1135 = vmatpush.bf16.msra.mxu0 0
        %1136 = vmatpush.bf16.msra.mxu0 0
        %1137 = vmatpush.bf16.msra.mxu0 0
        %1138 = vmatpush.bf16.msra.mxu0 0
        %1139 = vmatpush.bf16.msra.mxu0 0
        %1140 = vmatpush.bf16.msra.mxu0 0
        %1141 = vmatpush.bf16.msra.mxu0 %v1132
        %1142 = vmatmul.bf16.gmra.mxu0 %v1129
        %v1143 = vpop.f32.mrf.mxu0
        %v1144 = vadd.f32 0.0, %v1143
        %v1145 = vpop.f32.mrf.mxu0
        %1146 = vdwg.mxu0
        %1148 = vrot.lane.b32.xlu0 %v1144, 8
        %v1149 = vpop.permute.xlu0 %1148
        %vm1151 = vcmask 130112
        %1152 = vst.msk [vmem:[#allocation3] sm:$0xff] %vm1151, %v1149
        %1153 = vrot.lane.b32.xlu0 %v959, 80
        %v1154 = vpop.permute.xlu0 %1153
        %1156 = vxpose.xlu0.b32.start [1/16] %v1154, 128
        %1157 = vxpose.xlu0.b32.cont [2/16] 0.0, 128
        %1158 = vxpose.xlu0.b32.cont [3/16] 0.0, 128
        %1159 = vxpose.xlu0.b32.cont [4/16] 0.0, 128
        %1160 = vxpose.xlu0.b32.cont [5/16] 0.0, 128
        %1161 = vxpose.xlu0.b32.cont [6/16] 0.0, 128
        %1162 = vxpose.xlu0.b32.cont [7/16] 0.0, 128
        %1163 = vxpose.xlu0.b32.cont [8/16] 0.0, 128
        %1164 = vxpose.xlu0.b32.cont [9/16] 0.0, 128
        %1165 = vxpose.xlu0.b32.cont [10/16] 0.0, 128
        %1166 = vxpose.xlu0.b32.cont [11/16] 0.0, 128
        %1167 = vxpose.xlu0.b32.cont [12/16] 0.0, 128
        %1168 = vxpose.xlu0.b32.cont [13/16] 0.0, 128
        %1169 = vxpose.xlu0.b32.cont [14/16] 0.0, 128
        %1170 = vxpose.xlu0.b32.cont [15/16] 0.0, 128
        %1171 = vxpose.xlu0.b32.end [16/16] 0.0, 128
        %v1172 = vpop.trf.xlu0
        %v1173 = vpop.trf.xlu0
        %v1174 = vpop.trf.xlu0
        %v1175 = vpop.trf.xlu0
        %v1176 = vpop.trf.xlu0
        %v1177 = vpop.trf.xlu0
        %v1178 = vpop.trf.xlu0
        %v1179 = vpop.trf.xlu0
        %v1180 = vpop.trf.xlu0
        %v1181 = vpop.trf.xlu0
        %v1182 = vpop.trf.xlu0
        %v1183 = vpop.trf.xlu0
        %v1184 = vpop.trf.xlu0
        %v1185 = vpop.trf.xlu0
        %v1186 = vpop.trf.xlu0
        %v1187 = vpop.trf.xlu0
        %v1188 = vpack.c.bf16 %v1172, %v1172
        %1189 = vrot.lane.b32.xlu0 %v999, 112
        %v1190 = vpop.permute.xlu0 %1189
        %v1192 = vsel %vm1001, %v1190, 0
        %v1195 = vsel %vm1005, %v1188, 0
        %1197 = vmatpush.bf16.msra.mxu0 0
        %1198 = vmatpush.bf16.msra.mxu0 0
        %1199 = vmatpush.bf16.msra.mxu0 0
        %1200 = vmatpush.bf16.msra.mxu0 0
        %1201 = vmatpush.bf16.msra.mxu0 0
        %1202 = vmatpush.bf16.msra.mxu0 0
        %1203 = vmatpush.bf16.msra.mxu0 0
        %1204 = vmatpush.bf16.msra.mxu0 %v1195
        %1205 = vmatmul.bf16.gmra.mxu0 %v1192
        %v1206 = vpop.f32.mrf.mxu0
        %v1207 = vadd.f32 %v962, %v1206
        %v1208 = vpop.f32.mrf.mxu0
        %1209 = vdwg.mxu0
        %v1210 = vsel %vm1001, %v1207, -inf
        %1211 = vmax.xlane.f32.xlu0 %v1210
        %v1212 = vpop.xlane.xlu0 %1211
        %v1213 = vsub.f32 %v1207, %v1212
        %v1214 = vmul.f32 %v1213, 1.442695
        %v1215 = vpow.pop %v1214
        %v1216 = vsel %vm1001, %v1215, 0.0
        %1217 = vadd.xlane.f32.xlu0 %v1216
        %v1218 = vpop.xlane.xlu0 %1217
        %v1219 = vrcp.pop %v1218
        %v1220 = vmul.f32 %v1215, %v1219
        %v1221 = vpack.c.bf16 %v1220, %v1220
        %1222 = vrot.lane.b32.xlu0 %v999, 48
        %v1223 = vpop.permute.xlu0 %1222
        %v1225 = vsel %vm1001, %v1221, 0
        %v1228 = vsel %vm1005, %v1223, 0
        %1230 = vmatpush.bf16.msra.mxu0 0
        %1231 = vmatpush.bf16.msra.mxu0 0
        %1232 = vmatpush.bf16.msra.mxu0 0
        %1233 = vmatpush.bf16.msra.mxu0 0
        %1234 = vmatpush.bf16.msra.mxu0 0
        %1235 = vmatpush.bf16.msra.mxu0 0
        %1236 = vmatpush.bf16.msra.mxu0 0
        %1237 = vmatpush.bf16.msra.mxu0 %v1228
        %1238 = vmatmul.bf16.gmra.mxu0 %v1225
        %v1239 = vpop.f32.mrf.mxu0
        %v1240 = vadd.f32 0.0, %v1239
        %v1241 = vpop.f32.mrf.mxu0
        %1242 = vdwg.mxu0
        %1244 = vrot.lane.b32.xlu0 %v1240, 16
        %v1245 = vpop.permute.xlu0 %1244
        %vm1247 = vcmask 195712
        %1248 = vst.msk [vmem:[#allocation3] sm:$0xff] %vm1247, %v1245
        %1249 = vrot.lane.b32.xlu0 %v959, 72
        %v1250 = vpop.permute.xlu0 %1249
        %1252 = vxpose.xlu0.b32.start [1/16] %v1250, 128
        %1253 = vxpose.xlu0.b32.cont [2/16] 0.0, 128
        %1254 = vxpose.xlu0.b32.cont [3/16] 0.0, 128
        %1255 = vxpose.xlu0.b32.cont [4/16] 0.0, 128
        %1256 = vxpose.xlu0.b32.cont [5/16] 0.0, 128
        %1257 = vxpose.xlu0.b32.cont [6/16] 0.0, 128
        %1258 = vxpose.xlu0.b32.cont [7/16] 0.0, 128
        %1259 = vxpose.xlu0.b32.cont [8/16] 0.0, 128
        %1260 = vxpose.xlu0.b32.cont [9/16] 0.0, 128
        %1261 = vxpose.xlu0.b32.cont [10/16] 0.0, 128
        %1262 = vxpose.xlu0.b32.cont [11/16] 0.0, 128
        %1263 = vxpose.xlu0.b32.cont [12/16] 0.0, 128
        %1264 = vxpose.xlu0.b32.cont [13/16] 0.0, 128
        %1265 = vxpose.xlu0.b32.cont [14/16] 0.0, 128
        %1266 = vxpose.xlu0.b32.cont [15/16] 0.0, 128
        %1267 = vxpose.xlu0.b32.end [16/16] 0.0, 128
        %v1268 = vpop.trf.xlu0
        %v1269 = vpop.trf.xlu0
        %v1270 = vpop.trf.xlu0
        %v1271 = vpop.trf.xlu0
        %v1272 = vpop.trf.xlu0
        %v1273 = vpop.trf.xlu0
        %v1274 = vpop.trf.xlu0
        %v1275 = vpop.trf.xlu0
        %v1276 = vpop.trf.xlu0
        %v1277 = vpop.trf.xlu0
        %v1278 = vpop.trf.xlu0
        %v1279 = vpop.trf.xlu0
        %v1280 = vpop.trf.xlu0
        %v1281 = vpop.trf.xlu0
        %v1282 = vpop.trf.xlu0
        %v1283 = vpop.trf.xlu0
        %v1284 = vpack.c.bf16 %v1268, %v1268
        %1285 = vrot.lane.b32.xlu0 %v999, 104
        %v1286 = vpop.permute.xlu0 %1285
        %v1288 = vsel %vm1001, %v1286, 0
        %v1291 = vsel %vm1005, %v1284, 0
        %1293 = vmatpush.bf16.msra.mxu0 0
        %1294 = vmatpush.bf16.msra.mxu0 0
        %1295 = vmatpush.bf16.msra.mxu0 0
        %1296 = vmatpush.bf16.msra.mxu0 0
        %1297 = vmatpush.bf16.msra.mxu0 0
        %1298 = vmatpush.bf16.msra.mxu0 0
        %1299 = vmatpush.bf16.msra.mxu0 0
        %1300 = vmatpush.bf16.msra.mxu0 %v1291
        %1301 = vmatmul.bf16.gmra.mxu0 %v1288
        %v1302 = vpop.f32.mrf.mxu0
        %v1303 = vadd.f32 %v962, %v1302
        %v1304 = vpop.f32.mrf.mxu0
        %1305 = vdwg.mxu0
        %v1306 = vsel %vm1001, %v1303, -inf
        %1307 = vmax.xlane.f32.xlu0 %v1306
        %v1308 = vpop.xlane.xlu0 %1307
        %v1309 = vsub.f32 %v1303, %v1308
        %v1310 = vmul.f32 %v1309, 1.442695
        %v1311 = vpow.pop %v1310
        %v1312 = vsel %vm1001, %v1311, 0.0
        %1313 = vadd.xlane.f32.xlu0 %v1312
        %v1314 = vpop.xlane.xlu0 %1313
        %v1315 = vrcp.pop %v1314
        %v1316 = vmul.f32 %v1311, %v1315
        %v1317 = vpack.c.bf16 %v1316, %v1316
        %1318 = vrot.lane.b32.xlu0 %v999, 40
        %v1319 = vpop.permute.xlu0 %1318
        %v1321 = vsel %vm1001, %v1317, 0
        %v1324 = vsel %vm1005, %v1319, 0
        %1326 = vmatpush.bf16.msra.mxu0 0
        %1327 = vmatpush.bf16.msra.mxu0 0
        %1328 = vmatpush.bf16.msra.mxu0 0
        %1329 = vmatpush.bf16.msra.mxu0 0
        %1330 = vmatpush.bf16.msra.mxu0 0
        %1331 = vmatpush.bf16.msra.mxu0 0
        %1332 = vmatpush.bf16.msra.mxu0 0
        %1333 = vmatpush.bf16.msra.mxu0 %v1324
        %1334 = vmatmul.bf16.gmra.mxu0 %v1321
        %v1335 = vpop.f32.mrf.mxu0
        %v1336 = vadd.f32 0.0, %v1335
        %v1337 = vpop.f32.mrf.mxu0
        %1338 = vdwg.mxu0
        %1340 = vrot.lane.b32.xlu0 %v1336, 24
        %v1341 = vpop.permute.xlu0 %1340
        %vm1343 = vcmask 261312
        %1344 = vst.msk [vmem:[#allocation3] sm:$0xff] %vm1343, %v1341
        %v1345 = vld [vmem:[#allocation3] sm:$0xff]
        %v1346 = vld [vmem:[%s838] sm:$0xf]
        %v1347 = vld [vmem:[%s838 + $0x4] sm:$0xf]
        %v1348 = vld [vmem:[%s838 + $0x8] sm:$0xf]
        %v1349 = vld [vmem:[%s838 + $0xc] sm:$0xf]
        %v1350 = vpack.c.bf16 %v1345, %v1345
        %v1351 = vld [vmem:[%s841] sm:$0x1]
        %v1353 = vperm.slane %v1351, 0
        %v1359 = vunpack.c.l.b16 %v1346
        %v1360 = vunpack.c.l.b16 %v1347
        %v1361 = vunpack.c.l.b16 %v1348
        %v1362 = vunpack.c.l.b16 %v1349
        %v1363 = vpack.c.b16 %v1360, %v1359
        %v1364 = vpack.c.b16 %v1362, %v1361
        %v1368 = vsel %vm887, %v1350, 0
        %1370 = vmatpush.bf16.msra.mxu0 0
        %1371 = vmatpush.bf16.msra.mxu0 0
        %1372 = vmatpush.bf16.msra.mxu0 0
        %1373 = vmatpush.bf16.msra.mxu0 0
        %1374 = vmatpush.bf16.msra.mxu0 0
        %1375 = vmatpush.bf16.msra.mxu0 0
        %1376 = vmatpush.bf16.msra.mxu0 %v1364
        %1377 = vmatpush.bf16.msra.mxu0 %v1363
        %1378 = vmatmul.bf16.gmra.mxu0 %v1368
        %v1379 = vpop.f32.mrf.mxu0
        %v1380 = vadd.f32 %v1353, %v1379
        %v1381 = vpop.f32.mrf.mxu0
        %1382 = vdwg.mxu0
        %v1383 = vadd.f32 %v924, %v1380
        %v1384 = vld [vmem:[%s850] sm:$0x1]
        %v1385 = vld [vmem:[%s853] sm:$0x1]
        %v1386 = vsel %vm887, %v1383, 0.0
        %1387 = vadd.xlane.f32.xlu0 %v1386
        %v1388 = vpop.xlane.xlu0 %1387
        %v1389 = vmul.f32 %v1388, %v897
        %v1390 = vsub.f32 %v1383, %v1389
        %v1391 = vmul.f32 %v1390, %v1390
        %v1392 = vsel %vm887, %v1391, 0.0
        %1393 = vadd.xlane.f32.xlu0 %v1392
        %v1394 = vpop.xlane.xlu0 %1393
        %v1395 = vmul.f32 %v1394, %v897
        %v1396 = vadd.f32 %v1395, 1e-06
        %v1397 = vrsqrt.pop %v1396
        %v1398 = vmul.f32 %v1397, %v1396
        %v1399 = vmul.f32 %v1398, %v1397
        %v1400 = vmul.f32 0.5, %v1399
        %v1401 = vsub.f32 1.5, %v1400
        %v1402 = vmul.f32 %v1397, %v1401
        %vm1403 = vweird.f32 %v1396
        %vm1404 = vweird.f32 %v1397
        %vm1405 = vmor %vm1403, %vm1404
        %v1406 = vsel %vm1405, %v1397, %v1402
        %v1407 = vmul.f32 %v1390, %v1406
        %v1409 = vperm.slane %v1384, 0
        %v1411 = vmul.f32 %v1407, %v1409
        %v1413 = vperm.slane %v1385, 0
        %v1415 = vadd.f32 %v1411, %v1413
        %v1416 = vld [vmem:[%s858] sm:$0xf]
        %v1417 = vld [vmem:[%s858 + $0x4] sm:$0xf]
        %v1418 = vld [vmem:[%s858 + $0x8] sm:$0xf]
        %v1419 = vld [vmem:[%s858 + $0xc] sm:$0xf]
        %v1420 = vpack.c.bf16 %v1415, %v1415
        %v1421 = vld [vmem:[%s861] sm:$0x1]
        %v1423 = vperm.slane %v1421, 0
        %v1429 = vunpack.c.l.b16 %v1416
        %v1430 = vunpack.c.l.b16 %v1417
        %v1431 = vunpack.c.l.b16 %v1418
        %v1432 = vunpack.c.l.b16 %v1419
        %v1433 = vpack.c.b16 %v1430, %v1429
        %v1434 = vpack.c.b16 %v1432, %v1431
        %v1438 = vsel %vm887, %v1420, 0
        %1440 = vmatpush.bf16.msra.mxu0 0
        %1441 = vmatpush.bf16.msra.mxu0 0
        %1442 = vmatpush.bf16.msra.mxu0 0
        %1443 = vmatpush.bf16.msra.mxu0 0
        %1444 = vmatpush.bf16.msra.mxu0 0
        %1445 = vmatpush.bf16.msra.mxu0 0
        %1446 = vmatpush.bf16.msra.mxu0 %v1434
        %1447 = vmatpush.bf16.msra.mxu0 %v1433
        %1448 = vmatmul.bf16.gmra.mxu0 %v1438
        %v1449 = vpop.f32.mrf.mxu0
        %v1450 = vadd.f32 %v1423, %v1449
        %v1451 = vpop.f32.mrf.mxu0
        %1452 = vdwg.mxu0
        %v1453 = vmul.f32 %v1450, 0.5
        %v1454 = vmul.f32 %v1450, 0.044715
        %v1455 = vmul.f32 %v1454, %v1450
        %v1456 = vmul.f32 %v1455, %v1450
        %v1457 = vadd.f32 %v1450, %v1456
        %v1458 = vmul.f32 %v1457, 0.7978846
        %v1459 = vtanh.pop %v1458
        %v1460 = vadd.f32 %v1459, 1.0
        %v1461 = vmul.f32 %v1453, %v1460
        %v1462 = vld [vmem:[%s866] sm:$0xf]
        %v1463 = vld [vmem:[%s866 + $0x4] sm:$0xf]
        %v1464 = vld [vmem:[%s866 + $0x8] sm:$0xf]
        %v1465 = vld [vmem:[%s866 + $0xc] sm:$0xf]
        %v1466 = vld [vmem:[%s866 + $0x10] sm:$0xf]
        %v1467 = vld [vmem:[%s866 + $0x14] sm:$0xf]
        %v1468 = vld [vmem:[%s866 + $0x18] sm:$0xf]
        %v1469 = vld [vmem:[%s866 + $0x1c] sm:$0xf]
        %v1470 = vpack.c.bf16 %v1461, %v1461
        %v1471 = vld [vmem:[%s869] sm:$0x1]
        %v1473 = vperm.slane %v1471, 0
        %v1483 = vunpack.c.l.b16 %v1462
        %v1484 = vunpack.c.l.b16 %v1463
        %v1485 = vunpack.c.l.b16 %v1464
        %v1486 = vunpack.c.l.b16 %v1465
        %v1487 = vunpack.c.l.b16 %v1466
        %v1488 = vunpack.c.l.b16 %v1467
        %v1489 = vunpack.c.l.b16 %v1468
        %v1490 = vunpack.c.l.b16 %v1469
        %v1491 = vpack.c.b16 %v1484, %v1483
        %v1492 = vpack.c.b16 %v1486, %v1485
        %v1493 = vpack.c.b16 %v1488, %v1487
        %v1494 = vpack.c.b16 %v1490, %v1489
        %vm1499 = vcmask 523264
        %v1501 = vsel %vm1499, %v1470, 0
        %1503 = vmatpush.bf16.msra.mxu0 0
        %1504 = vmatpush.bf16.msra.mxu0 0
        %1505 = vmatpush.bf16.msra.mxu0 0
        %1506 = vmatpush.bf16.msra.mxu0 0
        %1507 = vmatpush.bf16.msra.mxu0 %v1494
        %1508 = vmatpush.bf16.msra.mxu0 %v1493
        %1509 = vmatpush.bf16.msra.mxu0 %v1492
        %1510 = vmatpush.bf16.msra.mxu0 %v1491
        %1511 = vmatmul.bf16.gmra.mxu0 %v1501
        %v1512 = vpop.f32.mrf.mxu0
        %v1513 = vadd.f32 %v1473, %v1512
        %v1514 = vpop.f32.mrf.mxu0
        %1515 = vdwg.mxu0
        %v1516 = vadd.f32 %v1415, %v1513
        %v1517 = vld [vmem:[%s872] sm:$0x1]
        %v1518 = vld [vmem:[%s875] sm:$0x1]
        %v1519 = vsel %vm887, %v1516, 0.0
        %1520 = vadd.xlane.f32.xlu0 %v1519
        %v1521 = vpop.xlane.xlu0 %1520
        %v1522 = vmul.f32 %v1521, %v897
        %v1523 = vsub.f32 %v1516, %v1522
        %v1524 = vmul.f32 %v1523, %v1523
        %v1525 = vsel %vm887, %v1524, 0.0
        %1526 = vadd.xlane.f32.xlu0 %v1525
        %v1527 = vpop.xlane.xlu0 %1526
        %v1528 = vmul.f32 %v1527, %v897
        %v1529 = vadd.f32 %v1528, 1e-06
        %v1530 = vrsqrt.pop %v1529
        %v1531 = vmul.f32 %v1530, %v1529
        %v1532 = vmul.f32 %v1531, %v1530
        %v1533 = vmul.f32 0.5, %v1532
        %v1534 = vsub.f32 1.5, %v1533
        %v1535 = vmul.f32 %v1530, %v1534
        %vm1536 = vweird.f32 %v1529
        %vm1537 = vweird.f32 %v1530
        %vm1538 = vmor %vm1536, %vm1537
        %v1539 = vsel %vm1538, %v1530, %v1535
        %v1540 = vmul.f32 %v1523, %v1539
        %v1542 = vperm.slane %v1517, 0
        %v1544 = vmul.f32 %v1540, %v1542
        %v1546 = vperm.slane %v1518, 0
        %v1548 = vadd.f32 %v1544, %v1546
        %1549 = vst.msk [vmem:[#allocation2] sm:$0xff] %vm887, %v1548
        %p1550 = scmp.eq.s32.totalorder %s41, 1
        // Predicated region
        $region105: #{bert_forward.1} parent=99 // pred_check
          %p1551 = pneg %p1550
        $region106: #{bert_forward.1} parent=99 // pred_check_branch
          %1553 = sbr.rel (%p1551) target = $region108
        $region107: #{bert_forward.1} parent=99 // pred_region
          $region109: #{bert_forward.1} parent=107
            #allocation8 [shape = 's32[1]{0}', space=sflag, size = 0x4, scoped, tag = 'scoped memory for bert_forward.1']
            // Predicated region
            $region110: #{bert_forward.1} parent=109 // pred_check
              _
            $region111: #{bert_forward.1} parent=109 // pred_check_branch
              %1555 = sbr.rel (0) target = $region113
            $region112: #{bert_forward.1} parent=109 // pred_region
              loop: start=0, step=1, limit=1
              $region114: #{bert_forward.1} parent=112 // loop_pre_header
                _
              $region115: #{bert_forward.1} parent=112 // loop_header
                %s1557 = sphi 0, %s1561
                %p1558 = scmp.ge.s32.totalorder %s1557, 1
                %s1562 = sphi %s16, %s16
                %s1563 = sphi [#allocation4], [#allocation4]
              $region116: #{bert_forward.1} parent=112 // loop_header_branch
                %1560 = sbr.rel (%p1558) target = $region120
              $region117: #{bert_forward.1} parent=112 // loop_body
                %v1564 = vld [vmem:[%s1562] sm:$0xff]
                %1565 = vst [vmem:[%s1563] sm:$0xff] %v1564
                %v1566 = vld [vmem:[%s1562 + $0x8] sm:$0xff]
                %1567 = vst [vmem:[%s1563 + $0x8] sm:$0xff] %v1566
              $region118: #{bert_forward.1} parent=112 // loop_footer
                %s1561 = sadd.s32 1, %s1557
              $region119: #{bert_forward.1} parent=112 // loop_footer_branch
                %1556 = sbr.rel target = $region115
              $region120: #{bert_forward.1} parent=112 // loop_exit
                _
            $region113: #{bert_forward.1} parent=109 // pred_fallthru
              _
            // Predicated region
            $region121: #{bert_forward.1} parent=109 // pred_check
              _
            $region122: #{bert_forward.1} parent=109 // pred_check_branch
              %1569 = sbr.rel target = $region124
            $region123: #{bert_forward.1} parent=109 // pred_region
              _
            $region124: #{bert_forward.1} parent=109 // pred_fallthru
              _
            // Predicated region
            $region125: #{bert_forward.1} parent=109 // pred_check
              _
            $region126: #{bert_forward.1} parent=109 // pred_check_branch
              %1572 = sbr.rel (0) target = $region128
            $region127: #{bert_forward.1} parent=109 // pred_region
              %1573 = vsyncadd [#allocation8], 256
            $region128: #{bert_forward.1} parent=109 // pred_fallthru
              _
            %s1574 = smul.u32 4, 4
            %s1575 = smul.u32 %s1574, 1
            %s1576 = sshll.u32 %s1575, 4
            %1577 = dma.done [#allocation8], %s1576
          $region129: #{bert_forward.1} parent=107
            #allocation10 [shape = 's32[1]{0}', space=sflag, size = 0x4, scoped, tag = 'scoped memory for bert_forward.1']
            // Predicated region
            $region130: #{bert_forward.1} parent=129 // pred_check
              _
            $region131: #{bert_forward.1} parent=129 // pred_check_branch
              %1579 = sbr.rel (0) target = $region133
            $region132: #{bert_forward.1} parent=129 // pred_region
              loop: start=0, step=1, limit=1
              $region134: #{bert_forward.1} parent=132 // loop_pre_header
                _
              $region135: #{bert_forward.1} parent=132 // loop_header
                %s1581 = sphi 0, %s1585
                %p1582 = scmp.ge.s32.totalorder %s1581, 1
                %s1586 = sphi %s20, %s20
                %s1587 = sphi [#allocation5], [#allocation5]
              $region136: #{bert_forward.1} parent=132 // loop_header_branch
                %1584 = sbr.rel (%p1582) target = $region140
              $region137: #{bert_forward.1} parent=132 // loop_body
                %v1588 = vld [vmem:[%s1586] sm:$0xff]
                %1589 = vst [vmem:[%s1587] sm:$0xff] %v1588
                %v1590 = vld [vmem:[%s1586 + $0x8] sm:$0xff]
                %1591 = vst [vmem:[%s1587 + $0x8] sm:$0xff] %v1590
              $region138: #{bert_forward.1} parent=132 // loop_footer
                %s1585 = sadd.s32 1, %s1581
              $region139: #{bert_forward.1} parent=132 // loop_footer_branch
                %1580 = sbr.rel target = $region135
              $region140: #{bert_forward.1} parent=132 // loop_exit
                _
            $region133: #{bert_forward.1} parent=129 // pred_fallthru
              _
            // Predicated region
            $region141: #{bert_forward.1} parent=129 // pred_check
              _
            $region142: #{bert_forward.1} parent=129 // pred_check_branch
              %1593 = sbr.rel target = $region144
            $region143: #{bert_forward.1} parent=129 // pred_region
              _
            $region144: #{bert_forward.1} parent=129 // pred_fallthru
              _
            // Predicated region
            $region145: #{bert_forward.1} parent=129 // pred_check
              _
            $region146: #{bert_forward.1} parent=129 // pred_check_branch
              %1596 = sbr.rel (0) target = $region148
            $region147: #{bert_forward.1} parent=129 // pred_region
              %1597 = vsyncadd [#allocation10], 256
            $region148: #{bert_forward.1} parent=129 // pred_fallthru
              _
            %s1598 = smul.u32 4, 4
            %s1599 = smul.u32 %s1598, 1
            %s1600 = sshll.u32 %s1599, 4
            %1601 = dma.done [#allocation10], %s1600
          %v1602 = vld [vmem:[#allocation4] sm:$0xf]
          %v1603 = vld [vmem:[#allocation4 + $0x4] sm:$0xf]
          %v1604 = vld [vmem:[#allocation4 + $0x8] sm:$0xf]
          %v1605 = vld [vmem:[#allocation4 + $0xc] sm:$0xf]
          %v1606 = vpack.c.bf16 %v1548, %v1548
          %v1607 = vld [vmem:[%s17] sm:$0x1]
          %v1609 = vperm.slane %v1607, 0
          %v1615 = vunpack.c.l.b16 %v1602
          %v1616 = vunpack.c.l.b16 %v1603
          %v1617 = vunpack.c.l.b16 %v1604
          %v1618 = vunpack.c.l.b16 %v1605
          %v1619 = vpack.c.b16 %v1616, %v1615
          %v1620 = vpack.c.b16 %v1618, %v1617
          %v1624 = vsel %vm887, %v1606, 0
          %1626 = vmatpush.bf16.msra.mxu0 0
          %1627 = vmatpush.bf16.msra.mxu0 0
          %1628 = vmatpush.bf16.msra.mxu0 0
          %1629 = vmatpush.bf16.msra.mxu0 0
          %1630 = vmatpush.bf16.msra.mxu0 0
          %1631 = vmatpush.bf16.msra.mxu0 0
          %1632 = vmatpush.bf16.msra.mxu0 %v1620
          %1633 = vmatpush.bf16.msra.mxu0 %v1619
          %1634 = vmatmul.bf16.gmra.mxu0 %v1624
          %v1635 = vpop.f32.mrf.mxu0
          %v1636 = vadd.f32 %v1609, %v1635
          %v1637 = vpop.f32.mrf.mxu0
          %1638 = vdwg.mxu0
          %v1639 = vmul.f32 %v1636, 0.5
          %v1640 = vmul.f32 %v1636, 0.044715
          %v1641 = vmul.f32 %v1640, %v1636
          %v1642 = vmul.f32 %v1641, %v1636
          %v1643 = vadd.f32 %v1636, %v1642
          %v1644 = vmul.f32 %v1643, 0.7978846
          %v1645 = vtanh.pop %v1644
          %v1646 = vadd.f32 %v1645, 1.0
          %v1647 = vmul.f32 %v1639, %v1646
          %v1648 = vld [vmem:[%s18] sm:$0x1]
          %v1649 = vld [vmem:[%s19] sm:$0x1]
          %v1650 = vsel %vm887, %v1647, 0.0
          %1651 = vadd.xlane.f32.xlu0 %v1650
          %v1652 = vpop.xlane.xlu0 %1651
          %v1653 = vmul.f32 %v1652, %v897
          %v1654 = vsub.f32 %v1647, %v1653
          %v1655 = vmul.f32 %v1654, %v1654
          %v1656 = vsel %vm887, %v1655, 0.0
          %1657 = vadd.xlane.f32.xlu0 %v1656
          %v1658 = vpop.xlane.xlu0 %1657
          %v1659 = vmul.f32 %v1658, %v897
          %v1660 = vadd.f32 %v1659, 1e-06
          %v1661 = vrsqrt.pop %v1660
          %v1662 = vmul.f32 %v1661, %v1660
          %v1663 = vmul.f32 %v1662, %v1661
          %v1664 = vmul.f32 0.5, %v1663
          %v1665 = vsub.f32 1.5, %v1664
          %v1666 = vmul.f32 %v1661, %v1665
          %vm1667 = vweird.f32 %v1660
          %vm1668 = vweird.f32 %v1661
          %vm1669 = vmor %vm1667, %vm1668
          %v1670 = vsel %vm1669, %v1661, %v1666
          %v1671 = vmul.f32 %v1654, %v1670
          %v1673 = vperm.slane %v1648, 0
          %v1675 = vmul.f32 %v1671, %v1673
          %v1677 = vperm.slane %v1649, 0
          %v1679 = vadd.f32 %v1675, %v1677
          %v1680 = vld [vmem:[#allocation5] sm:$0xf]
          %v1681 = vld [vmem:[#allocation5 + $0x4] sm:$0xf]
          %v1682 = vld [vmem:[#allocation5 + $0x8] sm:$0xf]
          %v1683 = vld [vmem:[#allocation5 + $0xc] sm:$0xf]
          %v1684 = vpack.c.bf16 %v1679, %v1679
          %v1685 = vld [vmem:[%s21] sm:$0x1]
          %v1687 = vperm.slane %v1685, 0
          %v1693 = vunpack.c.l.b16 %v1680
          %v1694 = vunpack.c.l.b16 %v1681
          %v1695 = vunpack.c.l.b16 %v1682
          %v1696 = vunpack.c.l.b16 %v1683
          %v1697 = vpack.c.b16 %v1694, %v1693
          %v1698 = vpack.c.b16 %v1696, %v1695
          %v1702 = vsel %vm887, %v1684, 0
          %1704 = vmatpush.bf16.msra.mxu0 0
          %1705 = vmatpush.bf16.msra.mxu0 0
          %1706 = vmatpush.bf16.msra.mxu0 0
          %1707 = vmatpush.bf16.msra.mxu0 0
          %1708 = vmatpush.bf16.msra.mxu0 0
          %1709 = vmatpush.bf16.msra.mxu0 0
          %1710 = vmatpush.bf16.msra.mxu0 %v1698
          %1711 = vmatpush.bf16.msra.mxu0 %v1697
          %1712 = vmatmul.bf16.gmra.mxu0 %v1702
          %v1713 = vpop.f32.mrf.mxu0
          %v1714 = vadd.f32 %v1687, %v1713
          %v1715 = vpop.f32.mrf.mxu0
          %1716 = vdwg.mxu0
          %1717 = vst [vmem:[%s817] sm:$0xff] %v1714
        $region108: #{bert_forward.1} parent=99 // pred_fallthru
          _
        %s1718 = sand.u32 %s556, 1
        %s1719 = scalar_lea.sflag [#allocation7], %s1718
        %s1720 = sand.u32 %s556, 1
        %s1721 = smul.addr %s1720, 8
        %s1722 = scalar_lea.vmem [#allocation6], %s1721
        // Predicated region
        $region149: #{bert_forward.1} parent=99 // pred_check
          %p1723 = pneg %p566
        $region150: #{bert_forward.1} parent=99 // pred_check_branch
          %1725 = sbr.rel (%p1723) target = $region152
        $region151: #{bert_forward.1} parent=99 // pred_region
          %1727 = vsyncadd %s1719, 0
          %s1728 = smul.addr %s40, 8
          %s1729 = scalar_lea.hbm %s22, %s1728
          %s1731 = sshll.u32 %s1722, 4
          %s1732 = int_to_ptr.vmem [resolvable:$true] %s1731
          %s1733 = sshll.u32 %s1729, 4
          %s1734 = int_to_ptr.hbm [resolvable:$true] %s1733
          %1736 = dma.vmem_to_hbm [thread:$0]  %s1732, 128, %s1734, %s1719
        $region152: #{bert_forward.1} parent=99 // pred_fallthru
          _
      $region100: #{bert_forward.1} parent=5 // pred_fallthru
        _
      %p1737 = scmp.le.s32.totalorder 2, %s31
      // Predicated region
      $region153: #{bert_forward.1} parent=5 // pred_check
        %p1738 = pneg %p1737
      $region154: #{bert_forward.1} parent=5 // pred_check_branch
        %1740 = sbr.rel (%p1738) target = $region156
      $region155: #{bert_forward.1} parent=5 // pred_region
        %s1741 = ssub.s32 %s31, 2
        // Predicated region
        $region157: #{bert_forward.1} parent=155 // pred_check
          %p1742 = pneg %p572
        $region158: #{bert_forward.1} parent=155 // pred_check_branch
          %1744 = sbr.rel (%p1742) target = $region160
        $region159: #{bert_forward.1} parent=155 // pred_region
          %s1745 = sand.u32 %s557, 1
          %s1746 = scalar_lea.sflag [#allocation7], %s1745
          %s1747 = sand.u32 %s557, 1
          %s1748 = smul.addr %s1747, 8
          %s1749 = scalar_lea.vmem [#allocation6], %s1748
          %1751 = dma.done %s1746, 128
        $region160: #{bert_forward.1} parent=155 // pred_fallthru
          _
      $region156: #{bert_forward.1} parent=5 // pred_fallthru
        _
    $region6: #{bert_forward.1} parent=1 // loop_footer
      %s35 = sadd.s32 1, %s31
    $region7: #{bert_forward.1} parent=1 // loop_footer_branch
      %30 = sbr.rel target = $region3
    $region8: #{bert_forward.1} parent=1 // loop_exit
      _
    %1752 = vsyncpa [#allocation7], 1
    %s1753 = scalar_lea.sflag [#allocation7], 1
    %1754 = vsyncpa %s1753, 1

</llo_original>
